<compile_context>
chip_gen: v5e
topology: v5e:2x2
jax: 0.10.0
libtpu: 0.0.40
codegen_flags: <defaults>
</compile_context>

<pallas_src>
import functools

import jax
import jax.numpy as jnp
from jax.experimental import pallas as pl
from jax.experimental.pallas import tpu as pltpu

CIN = 64
COUT = 256
KH = KW = 3
PAD = 1


def _conv_gemm_kernel(x_ref, w_ref, b_ref, o_ref, acc_ref, *, out_w, out_rows):
    # x_ref : ((H+2)*W, KW*CIN) bf16  kw-unrolled padded rows, one batch elem
    # w_ref : (KH, KW*CIN, TCO) bf16  weights, rows ordered (kw, cin)
    # b_ref : (1, TCO)          f32   bias with the scalar `other` folded in
    # o_ref : (TCO, H*W)        f32   output block, already channel-major
    # acc_ref:(H*W, TCO)        f32   scratch accumulator
    #
    # Initialize the accumulator with the bias so the KH dots below are pure
    # ref-accumulates (MRB-friendly on v7x, low vreg pressure elsewhere).
    acc_ref[...] = jnp.broadcast_to(b_ref[...], acc_ref.shape)
    for kh in range(KH):
        # Contiguous, statically-offset row window: rows [kh*W, kh*W + H*W)
        # of the flattened (H+2, W) spatial grid.  kh*W is a multiple of 16
        # (W % 16 == 0), so this is an aligned, free bf16 sublane view.
        patch = x_ref[kh * out_w: kh * out_w + out_rows, :]        # (H*W, 192)
        acc_ref[...] += jnp.dot(patch, w_ref[kh],
                                preferred_element_type=jnp.float32)
    # Single in-kernel transpose -> NCHW-ordered output block (no separate
    # XLA transpose / extra HBM round trip after the kernel).
    o_ref[...] = acc_ref[...].T.astype(o_ref.dtype)


def conv2d_add(x_nchw, weight, bias, other, *, cout_tile=128):
    """x_nchw: (N, CIN, H, W) f32; weight: (COUT, CIN, 3, 3); bias: (COUT,).

    `other` must be a scalar (it is folded into the bias).
    Returns (N, COUT, H, W) f32, matching the PyTorch module.
    """
    N, C, H, W = x_nchw.shape
    assert C == CIN
    # bf16 sublane packing is 16 rows/vreg: the static kh*W row offsets stay
    # aligned views only when W % 16 == 0.
    assert W % 16 == 0, "kw-unrolled row layout requires W % 16 == 0 for bf16"
    assert COUT % cout_tile == 0
    assert H * W % 128 == 0, "output lane dim (H*W) must be a multiple of 128"

    # ---- layout prep (single XLA producer fusion) --------------------------
    # NCHW -> NHWC, zero-pad both spatial dims by 1.
    x_nhwc = jnp.transpose(x_nchw, (0, 2, 3, 1))                   # (N,H,W,CIN)
    x_pad = jnp.pad(x_nhwc, ((0, 0), (PAD, PAD), (PAD, PAD), (0, 0)))
    # kw-unrolled channels: (N, H+2, W, KW*CIN), channel order (kw, cin).
    x_cat = jnp.concatenate(
        [x_pad[:, :, kw:kw + W, :] for kw in range(KW)], axis=-1)
    # Flatten padded-H and W into rows, cast to bf16 (f32 accumulation below).
    x_rows = x_cat.reshape(N, (H + 2 * PAD) * W, KW * CIN).astype(jnp.bfloat16)

    # (COUT, CIN, KH, KW) -> (KH, KW, CIN, COUT) -> (KH, KW*CIN, COUT), bf16.
    w_k = jnp.transpose(weight, (2, 3, 1, 0)).reshape(
        KH, KW * CIN, COUT).astype(jnp.bfloat16)

    # Fold the scalar `other` into the bias (kept f32).
    b2d = (bias.astype(jnp.float32)
           + jnp.asarray(other, jnp.float32)).reshape(1, COUT)

    # ---- Pallas call --------------------------------------------------------
    n_cout = COUT // cout_tile
    kernel = functools.partial(_conv_gemm_kernel, out_w=W, out_rows=H * W)
    out = pl.pallas_call(
        kernel,
        out_shape=jax.ShapeDtypeStruct((N, COUT, H * W), jnp.float32),
        grid=(N, n_cout),
        in_specs=[
            # Whole kw-unrolled image for batch n; block index is constant
            # across the inner (COUT-tile) axis so it is fetched once per n.
            pl.BlockSpec((None, (H + 2 * PAD) * W, KW * CIN),
                         lambda n, j: (n, 0, 0)),
            pl.BlockSpec((KH, KW * CIN, cout_tile), lambda n, j: (0, 0, j)),
            pl.BlockSpec((1, cout_tile), lambda n, j: (0, j)),
        ],
        out_specs=pl.BlockSpec((None, cout_tile, H * W),
                               lambda n, j: (n, j, 0)),
        scratch_shapes=[pltpu.VMEM((H * W, cout_tile), jnp.float32)],
        compiler_params=pltpu.CompilerParams(
            dimension_semantics=("parallel", "parallel")),
    )(x_rows, w_k, b2d)

    # (N, COUT, H*W) -> (N, COUT, H, W): contiguous reshape, no relayout.
    return out.reshape(N, COUT, H, W)


def _reference(x_nchw, weight, bias, other):
    out = jax.lax.conv_general_dilated(
        x_nchw, weight,
        window_strides=(1, 1),
        padding=((PAD, PAD), (PAD, PAD)),
        dimension_numbers=("NCHW", "OIHW", "NCHW"),
    )
    return out + bias[None, :, None, None] + other


if __name__ == "__main__":
    key = jax.random.PRNGKey(0)
    k_x, k_w, k_b = jax.random.split(key, 3)

    # Small shapes consistent with the module (conv needs 64 input channels).
    N, H, W = 2, 16, 16
    x = jax.random.normal(k_x, (N, CIN, H, W), dtype=jnp.float32)

    # Deterministic parameter init (uniform, like torch's default fan-in scheme).
    fan_in = CIN * KH * KW
    bound = 1.0 / (fan_in ** 0.5)
    weight = jax.random.uniform(k_w, (COUT, CIN, KH, KW),
                                minval=-bound, maxval=bound, dtype=jnp.float32)
    bias = jax.random.uniform(k_b, (COUT,),
                              minval=-bound, maxval=bound, dtype=jnp.float32)

    other = 1.0  # matches `other = 1` in the original script (scalar only)

    conv2d_add_jit = jax.jit(conv2d_add)
    out = conv2d_add_jit(x, weight, bias, other)
    out = jax.block_until_ready(out)

    ref = _reference(x, weight, bias, other)
    assert out.shape == (N, COUT, H, W)
    # bf16 inputs / f32 accumulation: loosened tolerance vs. the pure-f32
    # reference (per the review's correctness note).
    assert jnp.allclose(out, ref, atol=2e-2, rtol=2e-2)

    print("KERNEL_OK")
</pallas_src>

<mosaic_0001>
module attributes {stable_mosaic.version = 11 : i64} {
  func.func @_conv_gemm_kernel(%arg0: i32, %arg1: i32, %arg2: memref<1x288x192xbf16, #tpu.memory_space<vmem>>, %arg3: memref<3x192x128xbf16, #tpu.memory_space<vmem>>, %arg4: memref<1x128xf32, #tpu.memory_space<vmem>>, %arg5: memref<1x128x256xf32, #tpu.memory_space<vmem>>, %arg6: memref<256x128xf32, #tpu.memory_space<vmem>>) attributes {dimension_semantics = [#tpu.dimension_semantics<parallel>, #tpu.dimension_semantics<parallel>], iteration_bounds = array<i64: 2, 2>, scalar_prefetch = 0 : i64, scratch_operands = 1 : i64, tpu.core_type = #tpu.core_type<tc>, window_params = [{transform_indices = @transform_0, window_bounds = array<i64: 1, 288, 192>}, {transform_indices = @transform_1, window_bounds = array<i64: 3, 192, 128>}, {transform_indices = @transform_2, window_bounds = array<i64: 1, 128>}, {transform_indices = @transform_3, window_bounds = array<i64: 1, 128, 256>}]} {
    %c0 = arith.constant 0 : index
    %c0_0 = arith.constant 0 : index
    %0 = vector.load %arg4[%c0, %c0_0] : memref<1x128xf32, #tpu.memory_space<vmem>>, vector<1x128xf32>
    %1 = vector.shape_cast %0 : vector<1x128xf32> to vector<1x128xf32>
    %2 = vector.broadcast %1 : vector<1x128xf32> to vector<256x128xf32>
    %c0_1 = arith.constant 0 : index
    %c0_2 = arith.constant 0 : index
    %3 = vector.load %arg6[%c0_1, %c0_2] : memref<256x128xf32, #tpu.memory_space<vmem>>, vector<256x128xf32>
    tpu.vector_store %arg6[%c0_1, %c0_2], %2 {strides = array<i32>} : memref<256x128xf32, #tpu.memory_space<vmem>>, vector<256x128xf32>,
    %c0_3 = arith.constant 0 : index
    %c0_4 = arith.constant 0 : index
    %c0_5 = arith.constant 0 : index
    %4 = vector.load %arg2[%c0_3, %c0_4, %c0_5] : memref<1x288x192xbf16, #tpu.memory_space<vmem>>, vector<1x256x192xbf16>
    %5 = vector.shape_cast %4 : vector<1x256x192xbf16> to vector<256x192xbf16>
    %c0_6 = arith.constant 0 : index
    %c0_7 = arith.constant 0 : index
    %6 = vector.load %arg6[%c0_6, %c0_7] : memref<256x128xf32, #tpu.memory_space<vmem>>, vector<256x128xf32>
    %c0_8 = arith.constant 0 : index
    %c0_9 = arith.constant 0 : index
    %c0_10 = arith.constant 0 : index
    %7 = vector.load %arg3[%c0_8, %c0_9, %c0_10] : memref<3x192x128xbf16, #tpu.memory_space<vmem>>, vector<1x192x128xbf16>
    %8 = vector.shape_cast %7 : vector<1x192x128xbf16> to vector<192x128xbf16>
    %cst = arith.constant dense<0.000000e+00> : vector<256x128xf32>
    %9 = tpu.matmul %5, %8, %cst {dimension_numbers = #tpu.dot_dimension_numbers<[1], [0], [0], [1], [0, 0, 1, 1], [], []>} : vector<256x192xbf16>, vector<192x128xbf16>, vector<256x128xf32> -> vector<256x128xf32>
    %10 = arith.addf %6, %9 : vector<256x128xf32>
    %c0_11 = arith.constant 0 : index
    %c0_12 = arith.constant 0 : index
    %11 = vector.load %arg6[%c0_11, %c0_12] : memref<256x128xf32, #tpu.memory_space<vmem>>, vector<256x128xf32>
    tpu.vector_store %arg6[%c0_11, %c0_12], %10 {strides = array<i32>} : memref<256x128xf32, #tpu.memory_space<vmem>>, vector<256x128xf32>,
    %c0_13 = arith.constant 0 : index
    %c16 = arith.constant 16 : index
    %c0_14 = arith.constant 0 : index
    %12 = vector.load %arg2[%c0_13, %c16, %c0_14] : memref<1x288x192xbf16, #tpu.memory_space<vmem>>, vector<1x256x192xbf16>
    %13 = vector.shape_cast %12 : vector<1x256x192xbf16> to vector<256x192xbf16>
    %c0_15 = arith.constant 0 : index
    %c0_16 = arith.constant 0 : index
    %14 = vector.load %arg6[%c0_15, %c0_16] : memref<256x128xf32, #tpu.memory_space<vmem>>, vector<256x128xf32>
    %c1 = arith.constant 1 : index
    %c0_17 = arith.constant 0 : index
    %c0_18 = arith.constant 0 : index
    %15 = vector.load %arg3[%c1, %c0_17, %c0_18] : memref<3x192x128xbf16, #tpu.memory_space<vmem>>, vector<1x192x128xbf16>
    %16 = vector.shape_cast %15 : vector<1x192x128xbf16> to vector<192x128xbf16>
    %cst_19 = arith.constant dense<0.000000e+00> : vector<256x128xf32>
    %17 = tpu.matmul %13, %16, %cst_19 {dimension_numbers = #tpu.dot_dimension_numbers<[1], [0], [0], [1], [0, 0, 1, 1], [], []>} : vector<256x192xbf16>, vector<192x128xbf16>, vector<256x128xf32> -> vector<256x128xf32>
    %18 = arith.addf %14, %17 : vector<256x128xf32>
    %c0_20 = arith.constant 0 : index
    %c0_21 = arith.constant 0 : index
    %19 = vector.load %arg6[%c0_20, %c0_21] : memref<256x128xf32, #tpu.memory_space<vmem>>, vector<256x128xf32>
    tpu.vector_store %arg6[%c0_20, %c0_21], %18 {strides = array<i32>} : memref<256x128xf32, #tpu.memory_space<vmem>>, vector<256x128xf32>,
    %c0_22 = arith.constant 0 : index
    %c32 = arith.constant 32 : index
    %c0_23 = arith.constant 0 : index
    %20 = vector.load %arg2[%c0_22, %c32, %c0_23] : memref<1x288x192xbf16, #tpu.memory_space<vmem>>, vector<1x256x192xbf16>
    %21 = vector.shape_cast %20 : vector<1x256x192xbf16> to vector<256x192xbf16>
    %c0_24 = arith.constant 0 : index
    %c0_25 = arith.constant 0 : index
    %22 = vector.load %arg6[%c0_24, %c0_25] : memref<256x128xf32, #tpu.memory_space<vmem>>, vector<256x128xf32>
    %c2 = arith.constant 2 : index
    %c0_26 = arith.constant 0 : index
    %c0_27 = arith.constant 0 : index
    %23 = vector.load %arg3[%c2, %c0_26, %c0_27] : memref<3x192x128xbf16, #tpu.memory_space<vmem>>, vector<1x192x128xbf16>
    %24 = vector.shape_cast %23 : vector<1x192x128xbf16> to vector<192x128xbf16>
    %cst_28 = arith.constant dense<0.000000e+00> : vector<256x128xf32>
    %25 = tpu.matmul %21, %24, %cst_28 {dimension_numbers = #tpu.dot_dimension_numbers<[1], [0], [0], [1], [0, 0, 1, 1], [], []>} : vector<256x192xbf16>, vector<192x128xbf16>, vector<256x128xf32> -> vector<256x128xf32>
    %26 = arith.addf %22, %25 : vector<256x128xf32>
    %c0_29 = arith.constant 0 : index
    %c0_30 = arith.constant 0 : index
    %27 = vector.load %arg6[%c0_29, %c0_30] : memref<256x128xf32, #tpu.memory_space<vmem>>, vector<256x128xf32>
    tpu.vector_store %arg6[%c0_29, %c0_30], %26 {strides = array<i32>} : memref<256x128xf32, #tpu.memory_space<vmem>>, vector<256x128xf32>,
    %c0_31 = arith.constant 0 : index
    %c0_32 = arith.constant 0 : index
    %28 = vector.load %arg6[%c0_31, %c0_32] : memref<256x128xf32, #tpu.memory_space<vmem>>, vector<256x128xf32>
    %29 = tpu.transpose %28, [1, 0] : vector<256x128xf32> -> vector<128x256xf32>
    %c0_33 = arith.constant 0 : index
    %c0_34 = arith.constant 0 : index
    %c0_35 = arith.constant 0 : index
    %30 = vector.load %arg5[%c0_33, %c0_34, %c0_35] : memref<1x128x256xf32, #tpu.memory_space<vmem>>, vector<1x128x256xf32>
    %31 = vector.shape_cast %30 : vector<1x128x256xf32> to vector<128x256xf32>
    %32 = vector.shape_cast %29 : vector<128x256xf32> to vector<1x128x256xf32>
    tpu.vector_store %arg5[%c0_33, %c0_34, %c0_35], %32 {strides = array<i32>} : memref<1x128x256xf32, #tpu.memory_space<vmem>>, vector<1x128x256xf32>,
    return
  }
  func.func @transform_0(%arg0: i32, %arg1: i32) -> (i32, i32, i32) {
    %c0_i32 = arith.constant 0 : i32
    %c0_i32_0 = arith.constant 0 : i32
    %c0_i32_1 = arith.constant 0 : i32
    return %arg0, %c0_i32, %c0_i32_0 : i32, i32, i32
  }
  func.func @transform_1(%arg0: i32, %arg1: i32) -> (i32, i32, i32) {
    %c0_i32 = arith.constant 0 : i32
    %c0_i32_0 = arith.constant 0 : i32
    %c0_i32_1 = arith.constant 0 : i32
    return %c0_i32, %c0_i32_0, %arg1 : i32, i32, i32
  }
  func.func @transform_2(%arg0: i32, %arg1: i32) -> (i32, i32) {
    %c0_i32 = arith.constant 0 : i32
    %c0_i32_0 = arith.constant 0 : i32
    return %c0_i32, %arg1 : i32, i32
  }
  func.func @transform_3(%arg0: i32, %arg1: i32) -> (i32, i32, i32) {
    %c0_i32 = arith.constant 0 : i32
    %c0_i32_0 = arith.constant 0 : i32
    return %arg0, %arg1, %c0_i32 : i32, i32, i32
  }
}

</mosaic_0001>

<llo_original>
// kernel: conv2d_add.1
$region0: #{conv2d_add.1}
  #allocation0 [shape = 'u32[]', space=smem, size = 0x4, offset = 0x4, fixed_abs, tag = 'smem constant byte address 0x4 - core index']
  #allocation1 [shape = 'u32[72,128]{1,0:T(1,128)}', space=vmem, size = 0x9000, scoped, tag = 'internal scratch']
  #allocation2 [shape = 'f32[256,128]{1,0:T(8,128)}', space=vmem, size = 0x20000, scoped, tag = 'scratch operand']
  %s0 = inlined_call_operand.vmem [shape: bf16[2,288,192], index: 0, kind: input, shape index: {}]
  %s1 = inlined_call_operand.vmem [shape: bf16[3,192,256], index: 1, kind: input, shape index: {}]
  %s2 = inlined_call_operand.vmem [shape: f32[1,256], index: 2, kind: input, shape index: {}]
  %s3 = inlined_call_operand.vmem [shape: f32[2,256,256], index: 3, kind: output, shape index: {}]
  %s4 = sld [smem:[#allocation0]]
  $region86: #{conv2d_add.1} parent=0
    _
  %s6 = ssub.s32 1, %s4
  %s7 = scalar_select 0, %s6, %s4
  $region1: #{conv2d_add.1} parent=0
    #allocation3 [shape = 'u8[294912]{0}', space=vmem, size = 0x48000, scoped, tag = 'input window, operand 1']
    loop: start=0, step=1, limit=6
    $region2: #{conv2d_add.1} parent=1 // loop_pre_header
      _
    $region3: #{conv2d_add.1} parent=1 // loop_header
      %s9 = sphi 0, %s13
      %p10 = scmp.ge.s32.totalorder %s9, 6
      %s16 = sphi 0, %s28
      %s17 = sphi 0, %s24
      %s18 = sphi 0, %s16
      %s19 = sphi 0, %s17
      %s20 = sphi 0, %s18
      %s21 = sphi 0, %s19
      %s31 = sphi 0, %s33
      %s34 = sphi 0, %s31
      %s35 = sphi 0, %s34
      %s51 = sphi 0, %s35
      %s57 = sphi 0, %s59
      %s60 = sphi 0, %s57
      %s61 = sphi 0, %s60
      %s77 = sphi 0, %s61
      %s83 = sphi 0, %s85
      %s86 = sphi 0, %s83
      %s87 = sphi 0, %s86
      %s103 = sphi 0, %s87
      %s111 = sphi 0, %s113
      %s114 = sphi 0, %s111
      %s115 = sphi 0, %s114
      %s131 = sphi 0, %s115
    $region4: #{conv2d_add.1} parent=1 // loop_header_branch
      %12 = sbr.rel (%p10) target = $region8
    $region5: #{conv2d_add.1} parent=1 // loop_body
      %s14 = ssub.s32 %s9, 1
      %s15 = ssub.s32 %s9, 2
      %s22 = sadd.s32 1, %s17
      %p23 = scmp.ge.s32.totalorder %s22, 2
      %s24 = scalar_select %p23, 0, %s22
      %s25 = sadd.s32 1, %s16
      %s26 = scalar_select %p23, %s25, %s16
      %p27 = scmp.ge.s32.totalorder %s26, 2
      %s28 = scalar_select %p27, 0, %s26
      %s29 = ssub.s32 %s16, %s28
      %p30 = scmp.eq.s32.totalorder %s29, 0
      %s32 = sadd.s32 %s31, 1
      %s33 = scalar_select %p30, %s31, %s32
      %p36 = pneg %p30
      %p37 = scmp.eq.s32.totalorder %s9, 3
      %p38 = por %p36, %p37
      %p39 = scmp.ne.s32.totalorder %s31, %s34
      %p40 = scmp.eq.s32.totalorder %s9, 0
      %p41 = por %p39, %p40
      %p42 = scmp.ne.s32.totalorder %s31, %s34
      %p43 = scmp.eq.s32.totalorder %s14, 3
      %p44 = por %p42, %p43
      %p45 = scmp.ne.s32.totalorder %s34, %s35
      %p46 = scmp.eq.s32.totalorder %s14, 0
      %p47 = por %p45, %p46
      %p48 = scmp.ne.s32.totalorder %s34, %s35
      %p49 = scmp.eq.s32.totalorder %s15, 3
      %p50 = por %p48, %p49
      %p52 = scmp.ne.s32.totalorder %s35, %s51
      %p53 = scmp.eq.s32.totalorder %s15, 0
      %p54 = por %p52, %p53
      %s55 = ssub.s32 %s17, %s24
      %p56 = scmp.eq.s32.totalorder %s55, 0
      %s58 = sadd.s32 %s57, 1
      %s59 = scalar_select %p56, %s57, %s58
      %p62 = pneg %p56
      %p63 = scmp.eq.s32.totalorder %s9, 3
      %p64 = por %p62, %p63
      %p65 = scmp.ne.s32.totalorder %s57, %s60
      %p66 = scmp.eq.s32.totalorder %s9, 0
      %p67 = por %p65, %p66
      %p68 = scmp.ne.s32.totalorder %s57, %s60
      %p69 = scmp.eq.s32.totalorder %s14, 3
      %p70 = por %p68, %p69
      %p71 = scmp.ne.s32.totalorder %s60, %s61
      %p72 = scmp.eq.s32.totalorder %s14, 0
      %p73 = por %p71, %p72
      %p74 = scmp.ne.s32.totalorder %s60, %s61
      %p75 = scmp.eq.s32.totalorder %s15, 3
      %p76 = por %p74, %p75
      %p78 = scmp.ne.s32.totalorder %s61, %s77
      %p79 = scmp.eq.s32.totalorder %s15, 0
      %p80 = por %p78, %p79
      %s81 = ssub.s32 %s17, %s24
      %p82 = scmp.eq.s32.totalorder %s81, 0
      %s84 = sadd.s32 %s83, 1
      %s85 = scalar_select %p82, %s83, %s84
      %p88 = pneg %p82
      %p89 = scmp.eq.s32.totalorder %s9, 3
      %p90 = por %p88, %p89
      %p91 = scmp.ne.s32.totalorder %s83, %s86
      %p92 = scmp.eq.s32.totalorder %s9, 0
      %p93 = por %p91, %p92
      %p94 = scmp.ne.s32.totalorder %s83, %s86
      %p95 = scmp.eq.s32.totalorder %s14, 3
      %p96 = por %p94, %p95
      %p97 = scmp.ne.s32.totalorder %s86, %s87
      %p98 = scmp.eq.s32.totalorder %s14, 0
      %p99 = por %p97, %p98
      %p100 = scmp.ne.s32.totalorder %s86, %s87
      %p101 = scmp.eq.s32.totalorder %s15, 3
      %p102 = por %p100, %p101
      %p104 = scmp.ne.s32.totalorder %s87, %s103
      %p105 = scmp.eq.s32.totalorder %s15, 0
      %p106 = por %p104, %p105
      %s107 = ssub.s32 %s16, %s28
      %s108 = ssub.s32 %s17, %s24
      %s109 = sor.u32 %s107, %s108
      %p110 = scmp.eq.s32.totalorder %s109, 0
      %s112 = sadd.s32 %s111, 1
      %s113 = scalar_select %p110, %s111, %s112
      %p116 = pneg %p110
      %p117 = scmp.eq.s32.totalorder %s9, 3
      %p118 = por %p116, %p117
      %p119 = scmp.ne.s32.totalorder %s111, %s114
      %p120 = scmp.eq.s32.totalorder %s9, 0
      %p121 = por %p119, %p120
      %p122 = scmp.ne.s32.totalorder %s111, %s114
      %p123 = scmp.eq.s32.totalorder %s14, 3
      %p124 = por %p122, %p123
      %p125 = scmp.ne.s32.totalorder %s114, %s115
      %p126 = scmp.eq.s32.totalorder %s14, 0
      %p127 = por %p125, %p126
      %p128 = scmp.ne.s32.totalorder %s114, %s115
      %p129 = scmp.eq.s32.totalorder %s15, 3
      %p130 = por %p128, %p129
      %p132 = scmp.ne.s32.totalorder %s115, %s131
      %p133 = scmp.eq.s32.totalorder %s15, 0
      %p134 = por %p132, %p133
      %p135 = scmp.le.s32.totalorder 1, %s9
      %p136 = scmp.lt.s32.totalorder %s9, 5
      %p137 = pnand %p135, %p136
      %p138 = pneg %p137
      // Predicated region
      $region9: #{conv2d_add.1} parent=5 // pred_check
        _
      $region10: #{conv2d_add.1} parent=5 // pred_check_branch
        %140 = sbr.rel (%p137) target = $region12
      $region11: #{conv2d_add.1} parent=5 // pred_region
        %s141 = ssub.s32 %s9, 1
      $region12: #{conv2d_add.1} parent=5 // pred_fallthru
        _
      %p142 = scmp.lt.s32.totalorder %s9, 4
      // Predicated region
      $region13: #{conv2d_add.1} parent=5 // pred_check
        %p143 = pneg %p142
      $region14: #{conv2d_add.1} parent=5 // pred_check_branch
        %145 = sbr.rel (%p143) target = $region16
      $region15: #{conv2d_add.1} parent=5 // pred_region
        // Predicated region
        $region17: #{conv2d_add.1} parent=15 // pred_check
          %p146 = pneg %p41
        $region18: #{conv2d_add.1} parent=15 // pred_check_branch
          %148 = sbr.rel (%p146) target = $region20
        $region19: #{conv2d_add.1} parent=15 // pred_region
          %p149 = scmp.lt.s32.totalorder %s16, 1
          %s150 = scalar_select %p149, %s16, 1
          %s151 = smul.addr %s150, 72
          %s152 = smul.addr %s151, 4
          %s153 = scalar_lea.vmem %s0, %s152
        $region20: #{conv2d_add.1} parent=15 // pred_fallthru
          _
        // Predicated region
        $region21: #{conv2d_add.1} parent=15 // pred_check
          %p154 = pneg %p67
        $region22: #{conv2d_add.1} parent=15 // pred_check_branch
          %156 = sbr.rel (%p154) target = $region24
        $region23: #{conv2d_add.1} parent=15 // pred_region
          %s157 = sand.u32 %s57, 1
          %s158 = sand.u32 %s57, 1
          %s159 = smul.addr %s158, 288
          %s160 = scalar_lea.vmem [#allocation3], %s159
          %s161 = smul.addr %s17, 4
          %s162 = scalar_lea.vmem %s1, %s161
          // Predicated region
          $region25: #{conv2d_add.1} parent=23 // pred_check
            _
          $region26: #{conv2d_add.1} parent=23 // pred_check_branch
            %164 = sbr.rel (0) target = $region28
          $region27: #{conv2d_add.1} parent=23 // pred_region
            // Predicated region
            $region29: #{conv2d_add.1} parent=27 // pred_check
              _
            $region30: #{conv2d_add.1} parent=27 // pred_check_branch
              %166 = sbr.rel target = $region32
            $region31: #{conv2d_add.1} parent=27 // pred_region
              // Predicated region
              $region44: #{conv2d_add.1} parent=31 // pred_check
                _
              $region45: #{conv2d_add.1} parent=31 // pred_check_branch
                %324 = sbr.rel (0) target = $region47
              $region46: #{conv2d_add.1} parent=31 // pred_region
                loop: start=0, step=1, limit=1
                $region48: #{conv2d_add.1} parent=46 // loop_pre_header
                  _
                $region49: #{conv2d_add.1} parent=46 // loop_header
                  %s326 = sphi 0, %s330
                  %p327 = scmp.ge.s32.totalorder %s326, 1
                  %s331 = sphi %s162, %s162
                  %s332 = sphi %s160, %s160
                $region50: #{conv2d_add.1} parent=46 // loop_header_branch
                  %329 = sbr.rel (%p327) target = $region54
                $region51: #{conv2d_add.1} parent=46 // loop_body
                  _
                $region52: #{conv2d_add.1} parent=46 // loop_footer
                  %s330 = sadd.s32 1, %s326
                $region53: #{conv2d_add.1} parent=46 // loop_footer_branch
                  %325 = sbr.rel target = $region49
                $region54: #{conv2d_add.1} parent=46 // loop_exit
                  _
                %s334 = ssub.s32 16, 1
                loop: start=0, step=1, limit=1
                $region55: #{conv2d_add.1} parent=46 // loop_pre_header
                  _
                $region56: #{conv2d_add.1} parent=46 // loop_header
                  %s336 = sphi 0, %s340
                  %p337 = scmp.ge.s32.totalorder %s336, 1
                  %s341 = sphi %s162, %s162
                  %s342 = sphi %s160, %s160
                $region57: #{conv2d_add.1} parent=46 // loop_header_branch
                  %339 = sbr.rel (%p337) target = $region61
                $region58: #{conv2d_add.1} parent=46 // loop_body
                  %v343 = vld [vmem:[%s341] sm:%s334]
                  %344 = vst [vmem:[%s342] sm:%s334] %v343
                  %v345 = vld [vmem:[%s341 + $0x8] sm:%s334]
                  %346 = vst [vmem:[%s342 + $0x4] sm:%s334] %v345
                  %v347 = vld [vmem:[%s341 + $0x10] sm:%s334]
                  %348 = vst [vmem:[%s342 + $0x8] sm:%s334] %v347
                  %v349 = vld [vmem:[%s341 + $0x18] sm:%s334]
                  %350 = vst [vmem:[%s342 + $0xc] sm:%s334] %v349
                  %v351 = vld [vmem:[%s341 + $0x20] sm:%s334]
                  %352 = vst [vmem:[%s342 + $0x10] sm:%s334] %v351
                  %v353 = vld [vmem:[%s341 + $0x28] sm:%s334]
                  %354 = vst [vmem:[%s342 + $0x14] sm:%s334] %v353
                  %v355 = vld [vmem:[%s341 + $0x30] sm:%s334]
                  %356 = vst [vmem:[%s342 + $0x18] sm:%s334] %v355
                  %v357 = vld [vmem:[%s341 + $0x38] sm:%s334]
                  %358 = vst [vmem:[%s342 + $0x1c] sm:%s334] %v357
                  %v359 = vld [vmem:[%s341 + $0x40] sm:%s334]
                  %360 = vst [vmem:[%s342 + $0x20] sm:%s334] %v359
                  %v361 = vld [vmem:[%s341 + $0x48] sm:%s334]
                  %362 = vst [vmem:[%s342 + $0x24] sm:%s334] %v361
                  %v363 = vld [vmem:[%s341 + $0x50] sm:%s334]
                  %364 = vst [vmem:[%s342 + $0x28] sm:%s334] %v363
                  %v365 = vld [vmem:[%s341 + $0x58] sm:%s334]
                  %366 = vst [vmem:[%s342 + $0x2c] sm:%s334] %v365
                  %v367 = vld [vmem:[%s341 + $0x60] sm:%s334]
                  %368 = vst [vmem:[%s342 + $0x30] sm:%s334] %v367
                  %v369 = vld [vmem:[%s341 + $0x68] sm:%s334]
                  %370 = vst [vmem:[%s342 + $0x34] sm:%s334] %v369
                  %v371 = vld [vmem:[%s341 + $0x70] sm:%s334]
                  %372 = vst [vmem:[%s342 + $0x38] sm:%s334] %v371
                  %v373 = vld [vmem:[%s341 + $0x78] sm:%s334]
                  %374 = vst [vmem:[%s342 + $0x3c] sm:%s334] %v373
                  %v375 = vld [vmem:[%s341 + $0x80] sm:%s334]
                  %376 = vst [vmem:[%s342 + $0x40] sm:%s334] %v375
                  %v377 = vld [vmem:[%s341 + $0x88] sm:%s334]
                  %378 = vst [vmem:[%s342 + $0x44] sm:%s334] %v377
                  %v379 = vld [vmem:[%s341 + $0x90] sm:%s334]
                  %380 = vst [vmem:[%s342 + $0x48] sm:%s334] %v379
                  %v381 = vld [vmem:[%s341 + $0x98] sm:%s334]
                  %382 = vst [vmem:[%s342 + $0x4c] sm:%s334] %v381
                  %v383 = vld [vmem:[%s341 + $0xa0] sm:%s334]
                  %384 = vst [vmem:[%s342 + $0x50] sm:%s334] %v383
                  %v385 = vld [vmem:[%s341 + $0xa8] sm:%s334]
                  %386 = vst [vmem:[%s342 + $0x54] sm:%s334] %v385
                  %v387 = vld [vmem:[%s341 + $0xb0] sm:%s334]
                  %388 = vst [vmem:[%s342 + $0x58] sm:%s334] %v387
                  %v389 = vld [vmem:[%s341 + $0xb8] sm:%s334]
                  %390 = vst [vmem:[%s342 + $0x5c] sm:%s334] %v389
                  %v391 = vld [vmem:[%s341 + $0xc0] sm:%s334]
                  %392 = vst [vmem:[%s342 + $0x60] sm:%s334] %v391
                  %v393 = vld [vmem:[%s341 + $0xc8] sm:%s334]
                  %394 = vst [vmem:[%s342 + $0x64] sm:%s334] %v393
                  %v395 = vld [vmem:[%s341 + $0xd0] sm:%s334]
                  %396 = vst [vmem:[%s342 + $0x68] sm:%s334] %v395
                  %v397 = vld [vmem:[%s341 + $0xd8] sm:%s334]
                  %398 = vst [vmem:[%s342 + $0x6c] sm:%s334] %v397
                  %v399 = vld [vmem:[%s341 + $0xe0] sm:%s334]
                  %400 = vst [vmem:[%s342 + $0x70] sm:%s334] %v399
                  %v401 = vld [vmem:[%s341 + $0xe8] sm:%s334]
                  %402 = vst [vmem:[%s342 + $0x74] sm:%s334] %v401
                  %v403 = vld [vmem:[%s341 + $0xf0] sm:%s334]
                  %404 = vst [vmem:[%s342 + $0x78] sm:%s334] %v403
                  %v405 = vld [vmem:[%s341 + $0xf8] sm:%s334]
                  %406 = vst [vmem:[%s342 + $0x7c] sm:%s334] %v405
                  %v407 = vld [vmem:[%s341 + $0x100] sm:%s334]
                  %408 = vst [vmem:[%s342 + $0x80] sm:%s334] %v407
                  %v409 = vld [vmem:[%s341 + $0x108] sm:%s334]
                  %410 = vst [vmem:[%s342 + $0x84] sm:%s334] %v409
                  %v411 = vld [vmem:[%s341 + $0x110] sm:%s334]
                  %412 = vst [vmem:[%s342 + $0x88] sm:%s334] %v411
                  %v413 = vld [vmem:[%s341 + $0x118] sm:%s334]
                  %414 = vst [vmem:[%s342 + $0x8c] sm:%s334] %v413
                  %v415 = vld [vmem:[%s341 + $0x120] sm:%s334]
                  %416 = vst [vmem:[%s342 + $0x90] sm:%s334] %v415
                  %v417 = vld [vmem:[%s341 + $0x128] sm:%s334]
                  %418 = vst [vmem:[%s342 + $0x94] sm:%s334] %v417
                  %v419 = vld [vmem:[%s341 + $0x130] sm:%s334]
                  %420 = vst [vmem:[%s342 + $0x98] sm:%s334] %v419
                  %v421 = vld [vmem:[%s341 + $0x138] sm:%s334]
                  %422 = vst [vmem:[%s342 + $0x9c] sm:%s334] %v421
                  %v423 = vld [vmem:[%s341 + $0x140] sm:%s334]
                  %424 = vst [vmem:[%s342 + $0xa0] sm:%s334] %v423
                  %v425 = vld [vmem:[%s341 + $0x148] sm:%s334]
                  %426 = vst [vmem:[%s342 + $0xa4] sm:%s334] %v425
                  %v427 = vld [vmem:[%s341 + $0x150] sm:%s334]
                  %428 = vst [vmem:[%s342 + $0xa8] sm:%s334] %v427
                  %v429 = vld [vmem:[%s341 + $0x158] sm:%s334]
                  %430 = vst [vmem:[%s342 + $0xac] sm:%s334] %v429
                  %v431 = vld [vmem:[%s341 + $0x160] sm:%s334]
                  %432 = vst [vmem:[%s342 + $0xb0] sm:%s334] %v431
                  %v433 = vld [vmem:[%s341 + $0x168] sm:%s334]
                  %434 = vst [vmem:[%s342 + $0xb4] sm:%s334] %v433
                  %v435 = vld [vmem:[%s341 + $0x170] sm:%s334]
                  %436 = vst [vmem:[%s342 + $0xb8] sm:%s334] %v435
                  %v437 = vld [vmem:[%s341 + $0x178] sm:%s334]
                  %438 = vst [vmem:[%s342 + $0xbc] sm:%s334] %v437
                  %v439 = vld [vmem:[%s341 + $0x180] sm:%s334]
                  %440 = vst [vmem:[%s342 + $0xc0] sm:%s334] %v439
                  %v441 = vld [vmem:[%s341 + $0x188] sm:%s334]
                  %442 = vst [vmem:[%s342 + $0xc4] sm:%s334] %v441
                  %v443 = vld [vmem:[%s341 + $0x190] sm:%s334]
                  %444 = vst [vmem:[%s342 + $0xc8] sm:%s334] %v443
                  %v445 = vld [vmem:[%s341 + $0x198] sm:%s334]
                  %446 = vst [vmem:[%s342 + $0xcc] sm:%s334] %v445
                  %v447 = vld [vmem:[%s341 + $0x1a0] sm:%s334]
                  %448 = vst [vmem:[%s342 + $0xd0] sm:%s334] %v447
                  %v449 = vld [vmem:[%s341 + $0x1a8] sm:%s334]
                  %450 = vst [vmem:[%s342 + $0xd4] sm:%s334] %v449
                  %v451 = vld [vmem:[%s341 + $0x1b0] sm:%s334]
                  %452 = vst [vmem:[%s342 + $0xd8] sm:%s334] %v451
                  %v453 = vld [vmem:[%s341 + $0x1b8] sm:%s334]
                  %454 = vst [vmem:[%s342 + $0xdc] sm:%s334] %v453
                  %v455 = vld [vmem:[%s341 + $0x1c0] sm:%s334]
                  %456 = vst [vmem:[%s342 + $0xe0] sm:%s334] %v455
                  %v457 = vld [vmem:[%s341 + $0x1c8] sm:%s334]
                  %458 = vst [vmem:[%s342 + $0xe4] sm:%s334] %v457
                  %v459 = vld [vmem:[%s341 + $0x1d0] sm:%s334]
                  %460 = vst [vmem:[%s342 + $0xe8] sm:%s334] %v459
                  %v461 = vld [vmem:[%s341 + $0x1d8] sm:%s334]
                  %462 = vst [vmem:[%s342 + $0xec] sm:%s334] %v461
                  %v463 = vld [vmem:[%s341 + $0x1e0] sm:%s334]
                  %464 = vst [vmem:[%s342 + $0xf0] sm:%s334] %v463
                  %v465 = vld [vmem:[%s341 + $0x1e8] sm:%s334]
                  %466 = vst [vmem:[%s342 + $0xf4] sm:%s334] %v465
                  %v467 = vld [vmem:[%s341 + $0x1f0] sm:%s334]
                  %468 = vst [vmem:[%s342 + $0xf8] sm:%s334] %v467
                  %v469 = vld [vmem:[%s341 + $0x1f8] sm:%s334]
                  %470 = vst [vmem:[%s342 + $0xfc] sm:%s334] %v469
                  %v471 = vld [vmem:[%s341 + $0x200] sm:%s334]
                  %472 = vst [vmem:[%s342 + $0x100] sm:%s334] %v471
                  %v473 = vld [vmem:[%s341 + $0x208] sm:%s334]
                  %474 = vst [vmem:[%s342 + $0x104] sm:%s334] %v473
                  %v475 = vld [vmem:[%s341 + $0x210] sm:%s334]
                  %476 = vst [vmem:[%s342 + $0x108] sm:%s334] %v475
                  %v477 = vld [vmem:[%s341 + $0x218] sm:%s334]
                  %478 = vst [vmem:[%s342 + $0x10c] sm:%s334] %v477
                  %v479 = vld [vmem:[%s341 + $0x220] sm:%s334]
                  %480 = vst [vmem:[%s342 + $0x110] sm:%s334] %v479
                  %v481 = vld [vmem:[%s341 + $0x228] sm:%s334]
                  %482 = vst [vmem:[%s342 + $0x114] sm:%s334] %v481
                  %v483 = vld [vmem:[%s341 + $0x230] sm:%s334]
                  %484 = vst [vmem:[%s342 + $0x118] sm:%s334] %v483
                  %v485 = vld [vmem:[%s341 + $0x238] sm:%s334]
                  %486 = vst [vmem:[%s342 + $0x11c] sm:%s334] %v485
                $region59: #{conv2d_add.1} parent=46 // loop_footer
                  %s340 = sadd.s32 1, %s336
                $region60: #{conv2d_add.1} parent=46 // loop_footer_branch
                  %335 = sbr.rel target = $region56
                $region61: #{conv2d_add.1} parent=46 // loop_exit
                  _
              $region47: #{conv2d_add.1} parent=31 // pred_fallthru
                _
            $region32: #{conv2d_add.1} parent=27 // pred_fallthru
              _
            // Predicated region
            $region33: #{conv2d_add.1} parent=27 // pred_check
              _
            $region34: #{conv2d_add.1} parent=27 // pred_check_branch
              %168 = sbr.rel (0) target = $region36
            $region35: #{conv2d_add.1} parent=27 // pred_region
              %s170 = ssub.s32 16, 1
              loop: start=0, step=1, limit=1
              $region37: #{conv2d_add.1} parent=35 // loop_pre_header
                _
              $region38: #{conv2d_add.1} parent=35 // loop_header
                %s172 = sphi 0, %s176
                %p173 = scmp.ge.s32.totalorder %s172, 1
                %s177 = sphi %s162, %s162
                %s178 = sphi %s160, %s160
              $region39: #{conv2d_add.1} parent=35 // loop_header_branch
                %175 = sbr.rel (%p173) target = $region43
              $region40: #{conv2d_add.1} parent=35 // loop_body
                %v179 = vld [vmem:[%s177] sm:%s170]
                %180 = vst [vmem:[%s178] sm:%s170] %v179
                %v181 = vld [vmem:[%s177 + $0x8] sm:%s170]
                %182 = vst [vmem:[%s178 + $0x4] sm:%s170] %v181
                %v183 = vld [vmem:[%s177 + $0x10] sm:%s170]
                %184 = vst [vmem:[%s178 + $0x8] sm:%s170] %v183
                %v185 = vld [vmem:[%s177 + $0x18] sm:%s170]
                %186 = vst [vmem:[%s178 + $0xc] sm:%s170] %v185
                %v187 = vld [vmem:[%s177 + $0x20] sm:%s170]
                %188 = vst [vmem:[%s178 + $0x10] sm:%s170] %v187
                %v189 = vld [vmem:[%s177 + $0x28] sm:%s170]
                %190 = vst [vmem:[%s178 + $0x14] sm:%s170] %v189
                %v191 = vld [vmem:[%s177 + $0x30] sm:%s170]
                %192 = vst [vmem:[%s178 + $0x18] sm:%s170] %v191
                %v193 = vld [vmem:[%s177 + $0x38] sm:%s170]
                %194 = vst [vmem:[%s178 + $0x1c] sm:%s170] %v193
                %v195 = vld [vmem:[%s177 + $0x40] sm:%s170]
                %196 = vst [vmem:[%s178 + $0x20] sm:%s170] %v195
                %v197 = vld [vmem:[%s177 + $0x48] sm:%s170]
                %198 = vst [vmem:[%s178 + $0x24] sm:%s170] %v197
                %v199 = vld [vmem:[%s177 + $0x50] sm:%s170]
                %200 = vst [vmem:[%s178 + $0x28] sm:%s170] %v199
                %v201 = vld [vmem:[%s177 + $0x58] sm:%s170]
                %202 = vst [vmem:[%s178 + $0x2c] sm:%s170] %v201
                %v203 = vld [vmem:[%s177 + $0x60] sm:%s170]
                %204 = vst [vmem:[%s178 + $0x30] sm:%s170] %v203
                %v205 = vld [vmem:[%s177 + $0x68] sm:%s170]
                %206 = vst [vmem:[%s178 + $0x34] sm:%s170] %v205
                %v207 = vld [vmem:[%s177 + $0x70] sm:%s170]
                %208 = vst [vmem:[%s178 + $0x38] sm:%s170] %v207
                %v209 = vld [vmem:[%s177 + $0x78] sm:%s170]
                %210 = vst [vmem:[%s178 + $0x3c] sm:%s170] %v209
                %v211 = vld [vmem:[%s177 + $0x80] sm:%s170]
                %212 = vst [vmem:[%s178 + $0x40] sm:%s170] %v211
                %v213 = vld [vmem:[%s177 + $0x88] sm:%s170]
                %214 = vst [vmem:[%s178 + $0x44] sm:%s170] %v213
                %v215 = vld [vmem:[%s177 + $0x90] sm:%s170]
                %216 = vst [vmem:[%s178 + $0x48] sm:%s170] %v215
                %v217 = vld [vmem:[%s177 + $0x98] sm:%s170]
                %218 = vst [vmem:[%s178 + $0x4c] sm:%s170] %v217
                %v219 = vld [vmem:[%s177 + $0xa0] sm:%s170]
                %220 = vst [vmem:[%s178 + $0x50] sm:%s170] %v219
                %v221 = vld [vmem:[%s177 + $0xa8] sm:%s170]
                %222 = vst [vmem:[%s178 + $0x54] sm:%s170] %v221
                %v223 = vld [vmem:[%s177 + $0xb0] sm:%s170]
                %224 = vst [vmem:[%s178 + $0x58] sm:%s170] %v223
                %v225 = vld [vmem:[%s177 + $0xb8] sm:%s170]
                %226 = vst [vmem:[%s178 + $0x5c] sm:%s170] %v225
                %v227 = vld [vmem:[%s177 + $0xc0] sm:%s170]
                %228 = vst [vmem:[%s178 + $0x60] sm:%s170] %v227
                %v229 = vld [vmem:[%s177 + $0xc8] sm:%s170]
                %230 = vst [vmem:[%s178 + $0x64] sm:%s170] %v229
                %v231 = vld [vmem:[%s177 + $0xd0] sm:%s170]
                %232 = vst [vmem:[%s178 + $0x68] sm:%s170] %v231
                %v233 = vld [vmem:[%s177 + $0xd8] sm:%s170]
                %234 = vst [vmem:[%s178 + $0x6c] sm:%s170] %v233
                %v235 = vld [vmem:[%s177 + $0xe0] sm:%s170]
                %236 = vst [vmem:[%s178 + $0x70] sm:%s170] %v235
                %v237 = vld [vmem:[%s177 + $0xe8] sm:%s170]
                %238 = vst [vmem:[%s178 + $0x74] sm:%s170] %v237
                %v239 = vld [vmem:[%s177 + $0xf0] sm:%s170]
                %240 = vst [vmem:[%s178 + $0x78] sm:%s170] %v239
                %v241 = vld [vmem:[%s177 + $0xf8] sm:%s170]
                %242 = vst [vmem:[%s178 + $0x7c] sm:%s170] %v241
                %v243 = vld [vmem:[%s177 + $0x100] sm:%s170]
                %244 = vst [vmem:[%s178 + $0x80] sm:%s170] %v243
                %v245 = vld [vmem:[%s177 + $0x108] sm:%s170]
                %246 = vst [vmem:[%s178 + $0x84] sm:%s170] %v245
                %v247 = vld [vmem:[%s177 + $0x110] sm:%s170]
                %248 = vst [vmem:[%s178 + $0x88] sm:%s170] %v247
                %v249 = vld [vmem:[%s177 + $0x118] sm:%s170]
                %250 = vst [vmem:[%s178 + $0x8c] sm:%s170] %v249
                %v251 = vld [vmem:[%s177 + $0x120] sm:%s170]
                %252 = vst [vmem:[%s178 + $0x90] sm:%s170] %v251
                %v253 = vld [vmem:[%s177 + $0x128] sm:%s170]
                %254 = vst [vmem:[%s178 + $0x94] sm:%s170] %v253
                %v255 = vld [vmem:[%s177 + $0x130] sm:%s170]
                %256 = vst [vmem:[%s178 + $0x98] sm:%s170] %v255
                %v257 = vld [vmem:[%s177 + $0x138] sm:%s170]
                %258 = vst [vmem:[%s178 + $0x9c] sm:%s170] %v257
                %v259 = vld [vmem:[%s177 + $0x140] sm:%s170]
                %260 = vst [vmem:[%s178 + $0xa0] sm:%s170] %v259
                %v261 = vld [vmem:[%s177 + $0x148] sm:%s170]
                %262 = vst [vmem:[%s178 + $0xa4] sm:%s170] %v261
                %v263 = vld [vmem:[%s177 + $0x150] sm:%s170]
                %264 = vst [vmem:[%s178 + $0xa8] sm:%s170] %v263
                %v265 = vld [vmem:[%s177 + $0x158] sm:%s170]
                %266 = vst [vmem:[%s178 + $0xac] sm:%s170] %v265
                %v267 = vld [vmem:[%s177 + $0x160] sm:%s170]
                %268 = vst [vmem:[%s178 + $0xb0] sm:%s170] %v267
                %v269 = vld [vmem:[%s177 + $0x168] sm:%s170]
                %270 = vst [vmem:[%s178 + $0xb4] sm:%s170] %v269
                %v271 = vld [vmem:[%s177 + $0x170] sm:%s170]
                %272 = vst [vmem:[%s178 + $0xb8] sm:%s170] %v271
                %v273 = vld [vmem:[%s177 + $0x178] sm:%s170]
                %274 = vst [vmem:[%s178 + $0xbc] sm:%s170] %v273
                %v275 = vld [vmem:[%s177 + $0x180] sm:%s170]
                %276 = vst [vmem:[%s178 + $0xc0] sm:%s170] %v275
                %v277 = vld [vmem:[%s177 + $0x188] sm:%s170]
                %278 = vst [vmem:[%s178 + $0xc4] sm:%s170] %v277
                %v279 = vld [vmem:[%s177 + $0x190] sm:%s170]
                %280 = vst [vmem:[%s178 + $0xc8] sm:%s170] %v279
                %v281 = vld [vmem:[%s177 + $0x198] sm:%s170]
                %282 = vst [vmem:[%s178 + $0xcc] sm:%s170] %v281
                %v283 = vld [vmem:[%s177 + $0x1a0] sm:%s170]
                %284 = vst [vmem:[%s178 + $0xd0] sm:%s170] %v283
                %v285 = vld [vmem:[%s177 + $0x1a8] sm:%s170]
                %286 = vst [vmem:[%s178 + $0xd4] sm:%s170] %v285
                %v287 = vld [vmem:[%s177 + $0x1b0] sm:%s170]
                %288 = vst [vmem:[%s178 + $0xd8] sm:%s170] %v287
                %v289 = vld [vmem:[%s177 + $0x1b8] sm:%s170]
                %290 = vst [vmem:[%s178 + $0xdc] sm:%s170] %v289
                %v291 = vld [vmem:[%s177 + $0x1c0] sm:%s170]
                %292 = vst [vmem:[%s178 + $0xe0] sm:%s170] %v291
                %v293 = vld [vmem:[%s177 + $0x1c8] sm:%s170]
                %294 = vst [vmem:[%s178 + $0xe4] sm:%s170] %v293
                %v295 = vld [vmem:[%s177 + $0x1d0] sm:%s170]
                %296 = vst [vmem:[%s178 + $0xe8] sm:%s170] %v295
                %v297 = vld [vmem:[%s177 + $0x1d8] sm:%s170]
                %298 = vst [vmem:[%s178 + $0xec] sm:%s170] %v297
                %v299 = vld [vmem:[%s177 + $0x1e0] sm:%s170]
                %300 = vst [vmem:[%s178 + $0xf0] sm:%s170] %v299
                %v301 = vld [vmem:[%s177 + $0x1e8] sm:%s170]
                %302 = vst [vmem:[%s178 + $0xf4] sm:%s170] %v301
                %v303 = vld [vmem:[%s177 + $0x1f0] sm:%s170]
                %304 = vst [vmem:[%s178 + $0xf8] sm:%s170] %v303
                %v305 = vld [vmem:[%s177 + $0x1f8] sm:%s170]
                %306 = vst [vmem:[%s178 + $0xfc] sm:%s170] %v305
                %v307 = vld [vmem:[%s177 + $0x200] sm:%s170]
                %308 = vst [vmem:[%s178 + $0x100] sm:%s170] %v307
                %v309 = vld [vmem:[%s177 + $0x208] sm:%s170]
                %310 = vst [vmem:[%s178 + $0x104] sm:%s170] %v309
                %v311 = vld [vmem:[%s177 + $0x210] sm:%s170]
                %312 = vst [vmem:[%s178 + $0x108] sm:%s170] %v311
                %v313 = vld [vmem:[%s177 + $0x218] sm:%s170]
                %314 = vst [vmem:[%s178 + $0x10c] sm:%s170] %v313
                %v315 = vld [vmem:[%s177 + $0x220] sm:%s170]
                %316 = vst [vmem:[%s178 + $0x110] sm:%s170] %v315
                %v317 = vld [vmem:[%s177 + $0x228] sm:%s170]
                %318 = vst [vmem:[%s178 + $0x114] sm:%s170] %v317
                %v319 = vld [vmem:[%s177 + $0x230] sm:%s170]
                %320 = vst [vmem:[%s178 + $0x118] sm:%s170] %v319
                %v321 = vld [vmem:[%s177 + $0x238] sm:%s170]
                %322 = vst [vmem:[%s178 + $0x11c] sm:%s170] %v321
              $region41: #{conv2d_add.1} parent=35 // loop_footer
                %s176 = sadd.s32 1, %s172
              $region42: #{conv2d_add.1} parent=35 // loop_footer_branch
                %171 = sbr.rel target = $region38
              $region43: #{conv2d_add.1} parent=35 // loop_exit
                _
            $region36: #{conv2d_add.1} parent=27 // pred_fallthru
              _
          $region28: #{conv2d_add.1} parent=23 // pred_fallthru
            _
          %487 = vnop
        $region24: #{conv2d_add.1} parent=15 // pred_fallthru
          _
        // Predicated region
        $region62: #{conv2d_add.1} parent=15 // pred_check
          %p488 = pneg %p93
        $region63: #{conv2d_add.1} parent=15 // pred_check_branch
          %490 = sbr.rel (%p488) target = $region65
        $region64: #{conv2d_add.1} parent=15 // pred_region
          %p491 = scmp.lt.s32.totalorder %s17, 1
          %s492 = scalar_select %p491, %s17, 1
          %s493 = scalar_lea.vmem %s2, %s492
        $region65: #{conv2d_add.1} parent=15 // pred_fallthru
          _
      $region16: #{conv2d_add.1} parent=5 // pred_fallthru
        _
      %p494 = scmp.le.s32.totalorder 1, %s9
      %p495 = scmp.lt.s32.totalorder %s9, 5
      %p496 = pnand %p494, %p495
      %p497 = pneg %p496
      // Predicated region
      $region66: #{conv2d_add.1} parent=5 // pred_check
        _
      $region67: #{conv2d_add.1} parent=5 // pred_check_branch
        %499 = sbr.rel (%p496) target = $region69
      $region68: #{conv2d_add.1} parent=5 // pred_region
        %s500 = ssub.s32 %s9, 1
        %s501 = sand.u32 %s60, 1
        %s502 = sand.u32 %s60, 1
        %s503 = smul.addr %s502, 288
        %s504 = scalar_lea.vmem [#allocation3], %s503
        // Predicated region
        $region70: #{conv2d_add.1} parent=68 // pred_check
          %p505 = pneg %p73
        $region71: #{conv2d_add.1} parent=68 // pred_check_branch
          %507 = sbr.rel (%p505) target = $region73
        $region72: #{conv2d_add.1} parent=68 // pred_region
          _
        $region73: #{conv2d_add.1} parent=68 // pred_fallthru
          _
        %p508 = scmp.lt.s32.totalorder %s18, 1
        %s509 = scalar_select %p508, %s18, 1
        %s510 = smul.addr %s509, 72
        %s511 = smul.addr %s510, 4
        %s512 = scalar_lea.vmem %s0, %s511
        %p513 = pneg %p47
        %p514 = pneg %p44
        %s515 = sand.u32 %s60, 1
        %s516 = sand.u32 %s60, 1
        %s517 = smul.addr %s516, 288
        %s518 = scalar_lea.vmem [#allocation3], %s517
        %p519 = pneg %p73
        %p520 = pneg %p70
        %p521 = scmp.lt.s32.totalorder %s19, 1
        %s522 = scalar_select %p521, %s19, 1
        %s523 = scalar_lea.vmem %s2, %s522
        %p524 = pneg %p99
        %p525 = pneg %p96
        %p526 = pneg %p127
        %p527 = pneg %p124
        %s528 = smul.u32 16, %s19
        %p529 = scmp.lt.s32.totalorder %s18, 1
        %s530 = scalar_select %p529, %s18, 1
        %p531 = scmp.lt.s32.totalorder %s528, 31
        %s532 = scalar_select %p531, %s528, 31
        %s533 = smul.addr %s532, 2
        %s534 = smul.addr %s530, 64
        %s535 = sadd.s32 %s533, %s534
        %s536 = smul.addr %s535, 8
        %s537 = scalar_lea.vmem %s3, %s536
        %p538 = scmp.lt.s32.totalorder %s18, 1
        %s539 = scalar_select %p538, %s18, 1
        %s540 = smul.addr %s539, 72
        %s541 = smul.addr %s540, 4
        %s542 = scalar_lea.vmem %s0, %s541
        %p543 = scmp.lt.s32.totalorder %s19, 1
        %s544 = scalar_select %p543, %s19, 1
        %s545 = scalar_lea.vmem %s2, %s544
        %s546 = smul.u32 16, %s19
        %p547 = scmp.lt.s32.totalorder %s18, 1
        %s548 = scalar_select %p547, %s18, 1
        %p549 = scmp.lt.s32.totalorder %s546, 31
        %s550 = scalar_select %p549, %s546, 31
        %s551 = smul.addr %s550, 2
        %s552 = smul.addr %s548, 64
        %s553 = sadd.s32 %s551, %s552
        %s554 = smul.addr %s553, 8
        %s555 = scalar_lea.vmem %s3, %s554
        %s556 = smul.u32 16, %s19
        %v558 = vld [vmem:[%s545] sm:$0x1]
        %v560 = vperm.slane %v558, 0
        %562 = vst [vmem:[#allocation2] sm:$0xff] %v560
        %563 = vst [vmem:[#allocation2 + $0x8] sm:$0xff] %v560
        %564 = vst [vmem:[#allocation2 + $0x10] sm:$0xff] %v560
        %565 = vst [vmem:[#allocation2 + $0x18] sm:$0xff] %v560
        %566 = vst [vmem:[#allocation2 + $0x20] sm:$0xff] %v560
        %567 = vst [vmem:[#allocation2 + $0x28] sm:$0xff] %v560
        %568 = vst [vmem:[#allocation2 + $0x30] sm:$0xff] %v560
        %569 = vst [vmem:[#allocation2 + $0x38] sm:$0xff] %v560
        %570 = vst [vmem:[#allocation2 + $0x40] sm:$0xff] %v560
        %571 = vst [vmem:[#allocation2 + $0x48] sm:$0xff] %v560
        %572 = vst [vmem:[#allocation2 + $0x50] sm:$0xff] %v560
        %573 = vst [vmem:[#allocation2 + $0x58] sm:$0xff] %v560
        %574 = vst [vmem:[#allocation2 + $0x60] sm:$0xff] %v560
        %575 = vst [vmem:[#allocation2 + $0x68] sm:$0xff] %v560
        %576 = vst [vmem:[#allocation2 + $0x70] sm:$0xff] %v560
        %577 = vst [vmem:[#allocation2 + $0x78] sm:$0xff] %v560
        %578 = vst [vmem:[#allocation2 + $0x80] sm:$0xff] %v560
        %579 = vst [vmem:[#allocation2 + $0x88] sm:$0xff] %v560
        %580 = vst [vmem:[#allocation2 + $0x90] sm:$0xff] %v560
        %581 = vst [vmem:[#allocation2 + $0x98] sm:$0xff] %v560
        %582 = vst [vmem:[#allocation2 + $0xa0] sm:$0xff] %v560
        %583 = vst [vmem:[#allocation2 + $0xa8] sm:$0xff] %v560
        %584 = vst [vmem:[#allocation2 + $0xb0] sm:$0xff] %v560
        %585 = vst [vmem:[#allocation2 + $0xb8] sm:$0xff] %v560
        %586 = vst [vmem:[#allocation2 + $0xc0] sm:$0xff] %v560
        %587 = vst [vmem:[#allocation2 + $0xc8] sm:$0xff] %v560
        %588 = vst [vmem:[#allocation2 + $0xd0] sm:$0xff] %v560
        %589 = vst [vmem:[#allocation2 + $0xd8] sm:$0xff] %v560
        %590 = vst [vmem:[#allocation2 + $0xe0] sm:$0xff] %v560
        %591 = vst [vmem:[#allocation2 + $0xe8] sm:$0xff] %v560
        %592 = vst [vmem:[#allocation2 + $0xf0] sm:$0xff] %v560
        %593 = vst [vmem:[#allocation2 + $0xf8] sm:$0xff] %v560
        %v594 = vld [vmem:[%s542] sm:$0xff]
        %v595 = vld [vmem:[%s542 + $0x8] sm:$0xff]
        %v596 = vld [vmem:[%s542 + $0x10] sm:$0xff]
        %v597 = vld [vmem:[%s542 + $0x18] sm:$0xff]
        %v598 = vld [vmem:[%s542 + $0x20] sm:$0xff]
        %v599 = vld [vmem:[%s542 + $0x28] sm:$0xff]
        %v600 = vld [vmem:[%s542 + $0x30] sm:$0xff]
        %v601 = vld [vmem:[%s542 + $0x38] sm:$0xff]
        %v602 = vld [vmem:[%s542 + $0x40] sm:$0xff]
        %v603 = vld [vmem:[%s542 + $0x48] sm:$0xff]
        %v604 = vld [vmem:[%s542 + $0x50] sm:$0xff]
        %v605 = vld [vmem:[%s542 + $0x58] sm:$0xff]
        %v606 = vld [vmem:[%s542 + $0x60] sm:$0xff]
        %v607 = vld [vmem:[%s542 + $0x68] sm:$0xff]
        %v608 = vld [vmem:[%s542 + $0x70] sm:$0xff]
        %v609 = vld [vmem:[%s542 + $0x78] sm:$0xff]
        %v610 = vld [vmem:[%s542 + $0x80] sm:$0xff]
        %v611 = vld [vmem:[%s542 + $0x88] sm:$0xff]
        %v612 = vld [vmem:[%s542 + $0x90] sm:$0xff]
        %v613 = vld [vmem:[%s542 + $0x98] sm:$0xff]
        %v614 = vld [vmem:[%s542 + $0xa0] sm:$0xff]
        %v615 = vld [vmem:[%s542 + $0xa8] sm:$0xff]
        %v616 = vld [vmem:[%s542 + $0xb0] sm:$0xff]
        %v617 = vld [vmem:[%s542 + $0xb8] sm:$0xff]
        %v618 = vld [vmem:[%s542 + $0xc0] sm:$0xff]
        %v619 = vld [vmem:[%s542 + $0xc8] sm:$0xff]
        %v620 = vld [vmem:[%s542 + $0xd0] sm:$0xff]
        %v621 = vld [vmem:[%s542 + $0xd8] sm:$0xff]
        %v622 = vld [vmem:[%s542 + $0xe0] sm:$0xff]
        %v623 = vld [vmem:[%s542 + $0xe8] sm:$0xff]
        %v624 = vld [vmem:[%s542 + $0xf0] sm:$0xff]
        %v625 = vld [vmem:[%s542 + $0xf8] sm:$0xff]
        %v626 = vld [vmem:[#allocation2] sm:$0xff]
        %v627 = vld [vmem:[#allocation2 + $0x8] sm:$0xff]
        %v628 = vld [vmem:[#allocation2 + $0x10] sm:$0xff]
        %v629 = vld [vmem:[#allocation2 + $0x18] sm:$0xff]
        %v630 = vld [vmem:[#allocation2 + $0x20] sm:$0xff]
        %v631 = vld [vmem:[#allocation2 + $0x28] sm:$0xff]
        %v632 = vld [vmem:[#allocation2 + $0x30] sm:$0xff]
        %v633 = vld [vmem:[#allocation2 + $0x38] sm:$0xff]
        %v634 = vld [vmem:[#allocation2 + $0x40] sm:$0xff]
        %v635 = vld [vmem:[#allocation2 + $0x48] sm:$0xff]
        %v636 = vld [vmem:[#allocation2 + $0x50] sm:$0xff]
        %v637 = vld [vmem:[#allocation2 + $0x58] sm:$0xff]
        %v638 = vld [vmem:[#allocation2 + $0x60] sm:$0xff]
        %v639 = vld [vmem:[#allocation2 + $0x68] sm:$0xff]
        %v640 = vld [vmem:[#allocation2 + $0x70] sm:$0xff]
        %v641 = vld [vmem:[#allocation2 + $0x78] sm:$0xff]
        %v642 = vld [vmem:[#allocation2 + $0x80] sm:$0xff]
        %v643 = vld [vmem:[#allocation2 + $0x88] sm:$0xff]
        %v644 = vld [vmem:[#allocation2 + $0x90] sm:$0xff]
        %v645 = vld [vmem:[#allocation2 + $0x98] sm:$0xff]
        %v646 = vld [vmem:[#allocation2 + $0xa0] sm:$0xff]
        %v647 = vld [vmem:[#allocation2 + $0xa8] sm:$0xff]
        %v648 = vld [vmem:[#allocation2 + $0xb0] sm:$0xff]
        %v649 = vld [vmem:[#allocation2 + $0xb8] sm:$0xff]
        %v650 = vld [vmem:[#allocation2 + $0xc0] sm:$0xff]
        %v651 = vld [vmem:[#allocation2 + $0xc8] sm:$0xff]
        %v652 = vld [vmem:[#allocation2 + $0xd0] sm:$0xff]
        %v653 = vld [vmem:[#allocation2 + $0xd8] sm:$0xff]
        %v654 = vld [vmem:[#allocation2 + $0xe0] sm:$0xff]
        %v655 = vld [vmem:[#allocation2 + $0xe8] sm:$0xff]
        %v656 = vld [vmem:[#allocation2 + $0xf0] sm:$0xff]
        %v657 = vld [vmem:[#allocation2 + $0xf8] sm:$0xff]
        %v658 = vld [vmem:[%s504] sm:$0xf]
        %v659 = vld [vmem:[%s504 + $0x4] sm:$0xf]
        %v660 = vld [vmem:[%s504 + $0x8] sm:$0xf]
        %v661 = vld [vmem:[%s504 + $0xc] sm:$0xf]
        %v662 = vld [vmem:[%s504 + $0x10] sm:$0xf]
        %v663 = vld [vmem:[%s504 + $0x14] sm:$0xf]
        %v664 = vld [vmem:[%s504 + $0x18] sm:$0xf]
        %v665 = vld [vmem:[%s504 + $0x1c] sm:$0xf]
        %v666 = vld [vmem:[%s504 + $0x20] sm:$0xf]
        %v667 = vld [vmem:[%s504 + $0x24] sm:$0xf]
        %v668 = vld [vmem:[%s504 + $0x28] sm:$0xf]
        %v669 = vld [vmem:[%s504 + $0x2c] sm:$0xf]
        %v670 = vld [vmem:[%s504 + $0x30] sm:$0xf]
        %v671 = vld [vmem:[%s504 + $0x34] sm:$0xf]
        %v672 = vld [vmem:[%s504 + $0x38] sm:$0xf]
        %v673 = vld [vmem:[%s504 + $0x3c] sm:$0xf]
        %v674 = vld [vmem:[%s504 + $0x40] sm:$0xf]
        %v675 = vld [vmem:[%s504 + $0x44] sm:$0xf]
        %v676 = vld [vmem:[%s504 + $0x48] sm:$0xf]
        %v677 = vld [vmem:[%s504 + $0x4c] sm:$0xf]
        %v678 = vld [vmem:[%s504 + $0x50] sm:$0xf]
        %v679 = vld [vmem:[%s504 + $0x54] sm:$0xf]
        %v680 = vld [vmem:[%s504 + $0x58] sm:$0xf]
        %v681 = vld [vmem:[%s504 + $0x5c] sm:$0xf]
        %v714 = vunpack.c.l.b16 %v594
        %v715 = vunpack.c.h.b16 %v594
        %v716 = vunpack.c.l.b16 %v595
        %v717 = vunpack.c.h.b16 %v595
        %v718 = vunpack.c.l.b16 %v596
        %v719 = vunpack.c.h.b16 %v596
        %v720 = vunpack.c.l.b16 %v597
        %v721 = vunpack.c.h.b16 %v597
        %v722 = vunpack.c.l.b16 %v598
        %v723 = vunpack.c.h.b16 %v598
        %v724 = vunpack.c.l.b16 %v599
        %v725 = vunpack.c.h.b16 %v599
        %v726 = vunpack.c.l.b16 %v600
        %v727 = vunpack.c.h.b16 %v600
        %v728 = vunpack.c.l.b16 %v601
        %v729 = vunpack.c.h.b16 %v601
        %v730 = vunpack.c.l.b16 %v602
        %v731 = vunpack.c.h.b16 %v602
        %v732 = vunpack.c.l.b16 %v603
        %v733 = vunpack.c.h.b16 %v603
        %v734 = vunpack.c.l.b16 %v604
        %v735 = vunpack.c.h.b16 %v604
        %v736 = vunpack.c.l.b16 %v605
        %v737 = vunpack.c.h.b16 %v605
        %v738 = vunpack.c.l.b16 %v606
        %v739 = vunpack.c.h.b16 %v606
        %v740 = vunpack.c.l.b16 %v607
        %v741 = vunpack.c.h.b16 %v607
        %v742 = vunpack.c.l.b16 %v608
        %v743 = vunpack.c.h.b16 %v608
        %v744 = vunpack.c.l.b16 %v609
        %v745 = vunpack.c.h.b16 %v609
        %v746 = vunpack.c.l.b16 %v610
        %v747 = vunpack.c.h.b16 %v610
        %v748 = vunpack.c.l.b16 %v611
        %v749 = vunpack.c.h.b16 %v611
        %v750 = vunpack.c.l.b16 %v612
        %v751 = vunpack.c.h.b16 %v612
        %v752 = vunpack.c.l.b16 %v613
        %v753 = vunpack.c.h.b16 %v613
        %v754 = vunpack.c.l.b16 %v614
        %v755 = vunpack.c.h.b16 %v614
        %v756 = vunpack.c.l.b16 %v615
        %v757 = vunpack.c.h.b16 %v615
        %v758 = vunpack.c.l.b16 %v616
        %v759 = vunpack.c.h.b16 %v616
        %v760 = vunpack.c.l.b16 %v617
        %v761 = vunpack.c.h.b16 %v617
        %v762 = vunpack.c.l.b16 %v618
        %v763 = vunpack.c.h.b16 %v618
        %v764 = vunpack.c.l.b16 %v619
        %v765 = vunpack.c.h.b16 %v619
        %v766 = vunpack.c.l.b16 %v620
        %v767 = vunpack.c.h.b16 %v620
        %v768 = vunpack.c.l.b16 %v621
        %v769 = vunpack.c.h.b16 %v621
        %v770 = vunpack.c.l.b16 %v622
        %v771 = vunpack.c.h.b16 %v622
        %v772 = vunpack.c.l.b16 %v623
        %v773 = vunpack.c.h.b16 %v623
        %v774 = vunpack.c.l.b16 %v624
        %v775 = vunpack.c.h.b16 %v624
        %v776 = vunpack.c.l.b16 %v625
        %v777 = vunpack.c.h.b16 %v625
        %v778 = vpack.c.b16 %v716, %v714
        %v779 = vpack.c.b16 %v717, %v715
        %v780 = vpack.c.b16 %v720, %v718
        %v781 = vpack.c.b16 %v721, %v719
        %v782 = vpack.c.b16 %v724, %v722
        %v783 = vpack.c.b16 %v725, %v723
        %v784 = vpack.c.b16 %v728, %v726
        %v785 = vpack.c.b16 %v729, %v727
        %v786 = vpack.c.b16 %v732, %v730
        %v787 = vpack.c.b16 %v733, %v731
        %v788 = vpack.c.b16 %v736, %v734
        %v789 = vpack.c.b16 %v737, %v735
        %v790 = vpack.c.b16 %v740, %v738
        %v791 = vpack.c.b16 %v741, %v739
        %v792 = vpack.c.b16 %v744, %v742
        %v793 = vpack.c.b16 %v745, %v743
        %v794 = vpack.c.b16 %v748, %v746
        %v795 = vpack.c.b16 %v749, %v747
        %v796 = vpack.c.b16 %v752, %v750
        %v797 = vpack.c.b16 %v753, %v751
        %v798 = vpack.c.b16 %v756, %v754
        %v799 = vpack.c.b16 %v757, %v755
        %v800 = vpack.c.b16 %v760, %v758
        %v801 = vpack.c.b16 %v761, %v759
        %v802 = vpack.c.b16 %v764, %v762
        %v803 = vpack.c.b16 %v765, %v763
        %v804 = vpack.c.b16 %v768, %v766
        %v805 = vpack.c.b16 %v769, %v767
        %v806 = vpack.c.b16 %v772, %v770
        %v807 = vpack.c.b16 %v773, %v771
        %v808 = vpack.c.b16 %v776, %v774
        %v809 = vpack.c.b16 %v777, %v775
        %v850 = vunpack.c.l.b16 %v658
        %v851 = vunpack.c.l.b16 %v659
        %v852 = vunpack.c.l.b16 %v660
        %v853 = vunpack.c.l.b16 %v661
        %v854 = vunpack.c.l.b16 %v662
        %v855 = vunpack.c.l.b16 %v663
        %v856 = vunpack.c.l.b16 %v664
        %v857 = vunpack.c.l.b16 %v665
        %v858 = vunpack.c.l.b16 %v666
        %v859 = vunpack.c.l.b16 %v667
        %v860 = vunpack.c.l.b16 %v668
        %v861 = vunpack.c.l.b16 %v669
        %v862 = vunpack.c.l.b16 %v670
        %v863 = vunpack.c.l.b16 %v671
        %v864 = vunpack.c.l.b16 %v672
        %v865 = vunpack.c.l.b16 %v673
        %v866 = vunpack.c.l.b16 %v674
        %v867 = vunpack.c.l.b16 %v675
        %v868 = vunpack.c.l.b16 %v676
        %v869 = vunpack.c.l.b16 %v677
        %v870 = vunpack.c.l.b16 %v678
        %v871 = vunpack.c.l.b16 %v679
        %v872 = vunpack.c.l.b16 %v680
        %v873 = vunpack.c.l.b16 %v681
        %v874 = vpack.c.b16 %v851, %v850
        %v875 = vpack.c.b16 %v853, %v852
        %v876 = vpack.c.b16 %v855, %v854
        %v877 = vpack.c.b16 %v857, %v856
        %v878 = vpack.c.b16 %v859, %v858
        %v879 = vpack.c.b16 %v861, %v860
        %v880 = vpack.c.b16 %v863, %v862
        %v881 = vpack.c.b16 %v865, %v864
        %v882 = vpack.c.b16 %v867, %v866
        %v883 = vpack.c.b16 %v869, %v868
        %v884 = vpack.c.b16 %v871, %v870
        %v885 = vpack.c.b16 %v873, %v872
        %vm898 = vcmask 523264
        %v900 = vsel %vm898, %v779, 0
        %v903 = vsel %vm898, %v781, 0
        %v906 = vsel %vm898, %v783, 0
        %v909 = vsel %vm898, %v785, 0
        %v912 = vsel %vm898, %v787, 0
        %v915 = vsel %vm898, %v789, 0
        %v918 = vsel %vm898, %v791, 0
        %v921 = vsel %vm898, %v793, 0
        %v924 = vsel %vm898, %v795, 0
        %v927 = vsel %vm898, %v797, 0
        %v930 = vsel %vm898, %v799, 0
        %v933 = vsel %vm898, %v801, 0
        %v936 = vsel %vm898, %v803, 0
        %v939 = vsel %vm898, %v805, 0
        %v942 = vsel %vm898, %v807, 0
        %v945 = vsel %vm898, %v809, 0
        %947 = vmatpush.bf16.msra.mxu0 %v881
        %948 = vmatpush.bf16.msra.mxu0 %v880
        %949 = vmatpush.bf16.msra.mxu0 %v879
        %950 = vmatpush.bf16.msra.mxu0 %v878
        %951 = vmatpush.bf16.msra.mxu0 %v877
        %952 = vmatpush.bf16.msra.mxu0 %v876
        %953 = vmatpush.bf16.msra.mxu0 %v875
        %954 = vmatpush.bf16.msra.mxu0 %v874
        %955 = vmatmul.bf16.gmra.mxu0 %v778
        %v956 = vpop.f32.mrf.mxu0
        %v957 = vadd.f32 0.0, %v956
        %v958 = vpop.f32.mrf.mxu0
        %v959 = vadd.f32 0.0, %v958
        %960 = vmatmul.bf16.gmra.mxu0 %v780
        %v961 = vpop.f32.mrf.mxu0
        %v962 = vadd.f32 0.0, %v961
        %v963 = vpop.f32.mrf.mxu0
        %v964 = vadd.f32 0.0, %v963
        %965 = vmatmul.bf16.gmra.mxu0 %v782
        %v966 = vpop.f32.mrf.mxu0
        %v967 = vadd.f32 0.0, %v966
        %v968 = vpop.f32.mrf.mxu0
        %v969 = vadd.f32 0.0, %v968
        %970 = vmatmul.bf16.gmra.mxu0 %v784
        %v971 = vpop.f32.mrf.mxu0
        %v972 = vadd.f32 0.0, %v971
        %v973 = vpop.f32.mrf.mxu0
        %v974 = vadd.f32 0.0, %v973
        %975 = vmatmul.bf16.gmra.mxu0 %v786
        %v976 = vpop.f32.mrf.mxu0
        %v977 = vadd.f32 0.0, %v976
        %v978 = vpop.f32.mrf.mxu0
        %v979 = vadd.f32 0.0, %v978
        %980 = vmatmul.bf16.gmra.mxu0 %v788
        %v981 = vpop.f32.mrf.mxu0
        %v982 = vadd.f32 0.0, %v981
        %v983 = vpop.f32.mrf.mxu0
        %v984 = vadd.f32 0.0, %v983
        %985 = vmatmul.bf16.gmra.mxu0 %v790
        %v986 = vpop.f32.mrf.mxu0
        %v987 = vadd.f32 0.0, %v986
        %v988 = vpop.f32.mrf.mxu0
        %v989 = vadd.f32 0.0, %v988
        %990 = vmatmul.bf16.gmra.mxu0 %v792
        %v991 = vpop.f32.mrf.mxu0
        %v992 = vadd.f32 0.0, %v991
        %v993 = vpop.f32.mrf.mxu0
        %v994 = vadd.f32 0.0, %v993
        %995 = vmatmul.bf16.gmra.mxu0 %v794
        %v996 = vpop.f32.mrf.mxu0
        %v997 = vadd.f32 0.0, %v996
        %v998 = vpop.f32.mrf.mxu0
        %v999 = vadd.f32 0.0, %v998
        %1000 = vmatmul.bf16.gmra.mxu0 %v796
        %v1001 = vpop.f32.mrf.mxu0
        %v1002 = vadd.f32 0.0, %v1001
        %v1003 = vpop.f32.mrf.mxu0
        %v1004 = vadd.f32 0.0, %v1003
        %1005 = vmatmul.bf16.gmra.mxu0 %v798
        %v1006 = vpop.f32.mrf.mxu0
        %v1007 = vadd.f32 0.0, %v1006
        %v1008 = vpop.f32.mrf.mxu0
        %v1009 = vadd.f32 0.0, %v1008
        %1010 = vmatmul.bf16.gmra.mxu0 %v800
        %v1011 = vpop.f32.mrf.mxu0
        %v1012 = vadd.f32 0.0, %v1011
        %v1013 = vpop.f32.mrf.mxu0
        %v1014 = vadd.f32 0.0, %v1013
        %1015 = vmatmul.bf16.gmra.mxu0 %v802
        %v1016 = vpop.f32.mrf.mxu0
        %v1017 = vadd.f32 0.0, %v1016
        %v1018 = vpop.f32.mrf.mxu0
        %v1019 = vadd.f32 0.0, %v1018
        %1020 = vmatmul.bf16.gmra.mxu0 %v804
        %v1021 = vpop.f32.mrf.mxu0
        %v1022 = vadd.f32 0.0, %v1021
        %v1023 = vpop.f32.mrf.mxu0
        %v1024 = vadd.f32 0.0, %v1023
        %1025 = vmatmul.bf16.gmra.mxu0 %v806
        %v1026 = vpop.f32.mrf.mxu0
        %v1027 = vadd.f32 0.0, %v1026
        %v1028 = vpop.f32.mrf.mxu0
        %v1029 = vadd.f32 0.0, %v1028
        %1030 = vmatmul.bf16.gmra.mxu0 %v808
        %v1031 = vpop.f32.mrf.mxu0
        %v1032 = vadd.f32 0.0, %v1031
        %v1033 = vpop.f32.mrf.mxu0
        %v1034 = vadd.f32 0.0, %v1033
        %1035 = vdwg.mxu0
        %1036 = vmatpush.bf16.msra.mxu0 0
        %1037 = vmatpush.bf16.msra.mxu0 0
        %1038 = vmatpush.bf16.msra.mxu0 0
        %1039 = vmatpush.bf16.msra.mxu0 0
        %1040 = vmatpush.bf16.msra.mxu0 %v885
        %1041 = vmatpush.bf16.msra.mxu0 %v884
        %1042 = vmatpush.bf16.msra.mxu0 %v883
        %1043 = vmatpush.bf16.msra.mxu0 %v882
        %1044 = vmatmul.bf16.gmra.mxu0 %v900
        %v1045 = vpop.f32.mrf.mxu0
        %v1046 = vadd.f32 %v957, %v1045
        %v1047 = vpop.f32.mrf.mxu0
        %v1048 = vadd.f32 %v959, %v1047
        %1049 = vmatmul.bf16.gmra.mxu0 %v903
        %v1050 = vpop.f32.mrf.mxu0
        %v1051 = vadd.f32 %v962, %v1050
        %v1052 = vpop.f32.mrf.mxu0
        %v1053 = vadd.f32 %v964, %v1052
        %1054 = vmatmul.bf16.gmra.mxu0 %v906
        %v1055 = vpop.f32.mrf.mxu0
        %v1056 = vadd.f32 %v967, %v1055
        %v1057 = vpop.f32.mrf.mxu0
        %v1058 = vadd.f32 %v969, %v1057
        %1059 = vmatmul.bf16.gmra.mxu0 %v909
        %v1060 = vpop.f32.mrf.mxu0
        %v1061 = vadd.f32 %v972, %v1060
        %v1062 = vpop.f32.mrf.mxu0
        %v1063 = vadd.f32 %v974, %v1062
        %1064 = vmatmul.bf16.gmra.mxu0 %v912
        %v1065 = vpop.f32.mrf.mxu0
        %v1066 = vadd.f32 %v977, %v1065
        %v1067 = vpop.f32.mrf.mxu0
        %v1068 = vadd.f32 %v979, %v1067
        %1069 = vmatmul.bf16.gmra.mxu0 %v915
        %v1070 = vpop.f32.mrf.mxu0
        %v1071 = vadd.f32 %v982, %v1070
        %v1072 = vpop.f32.mrf.mxu0
        %v1073 = vadd.f32 %v984, %v1072
        %1074 = vmatmul.bf16.gmra.mxu0 %v918
        %v1075 = vpop.f32.mrf.mxu0
        %v1076 = vadd.f32 %v987, %v1075
        %v1077 = vpop.f32.mrf.mxu0
        %v1078 = vadd.f32 %v989, %v1077
        %1079 = vmatmul.bf16.gmra.mxu0 %v921
        %v1080 = vpop.f32.mrf.mxu0
        %v1081 = vadd.f32 %v992, %v1080
        %v1082 = vpop.f32.mrf.mxu0
        %v1083 = vadd.f32 %v994, %v1082
        %1084 = vmatmul.bf16.gmra.mxu0 %v924
        %v1085 = vpop.f32.mrf.mxu0
        %v1086 = vadd.f32 %v997, %v1085
        %v1087 = vpop.f32.mrf.mxu0
        %v1088 = vadd.f32 %v999, %v1087
        %1089 = vmatmul.bf16.gmra.mxu0 %v927
        %v1090 = vpop.f32.mrf.mxu0
        %v1091 = vadd.f32 %v1002, %v1090
        %v1092 = vpop.f32.mrf.mxu0
        %v1093 = vadd.f32 %v1004, %v1092
        %1094 = vmatmul.bf16.gmra.mxu0 %v930
        %v1095 = vpop.f32.mrf.mxu0
        %v1096 = vadd.f32 %v1007, %v1095
        %v1097 = vpop.f32.mrf.mxu0
        %v1098 = vadd.f32 %v1009, %v1097
        %1099 = vmatmul.bf16.gmra.mxu0 %v933
        %v1100 = vpop.f32.mrf.mxu0
        %v1101 = vadd.f32 %v1012, %v1100
        %v1102 = vpop.f32.mrf.mxu0
        %v1103 = vadd.f32 %v1014, %v1102
        %1104 = vmatmul.bf16.gmra.mxu0 %v936
        %v1105 = vpop.f32.mrf.mxu0
        %v1106 = vadd.f32 %v1017, %v1105
        %v1107 = vpop.f32.mrf.mxu0
        %v1108 = vadd.f32 %v1019, %v1107
        %1109 = vmatmul.bf16.gmra.mxu0 %v939
        %v1110 = vpop.f32.mrf.mxu0
        %v1111 = vadd.f32 %v1022, %v1110
        %v1112 = vpop.f32.mrf.mxu0
        %v1113 = vadd.f32 %v1024, %v1112
        %1114 = vmatmul.bf16.gmra.mxu0 %v942
        %v1115 = vpop.f32.mrf.mxu0
        %v1116 = vadd.f32 %v1027, %v1115
        %v1117 = vpop.f32.mrf.mxu0
        %v1118 = vadd.f32 %v1029, %v1117
        %1119 = vmatmul.bf16.gmra.mxu0 %v945
        %v1120 = vpop.f32.mrf.mxu0
        %v1121 = vadd.f32 %v1032, %v1120
        %v1122 = vpop.f32.mrf.mxu0
        %v1123 = vadd.f32 %v1034, %v1122
        %1124 = vdwg.mxu0
        %v1125 = vadd.f32 %v626, %v1046
        %v1126 = vadd.f32 %v627, %v1048
        %v1127 = vadd.f32 %v628, %v1051
        %v1128 = vadd.f32 %v629, %v1053
        %v1129 = vadd.f32 %v630, %v1056
        %v1130 = vadd.f32 %v631, %v1058
        %v1131 = vadd.f32 %v632, %v1061
        %v1132 = vadd.f32 %v633, %v1063
        %v1133 = vadd.f32 %v634, %v1066
        %v1134 = vadd.f32 %v635, %v1068
        %v1135 = vadd.f32 %v636, %v1071
        %v1136 = vadd.f32 %v637, %v1073
        %v1137 = vadd.f32 %v638, %v1076
        %v1138 = vadd.f32 %v639, %v1078
        %v1139 = vadd.f32 %v640, %v1081
        %v1140 = vadd.f32 %v641, %v1083
        %v1141 = vadd.f32 %v642, %v1086
        %v1142 = vadd.f32 %v643, %v1088
        %v1143 = vadd.f32 %v644, %v1091
        %v1144 = vadd.f32 %v645, %v1093
        %v1145 = vadd.f32 %v646, %v1096
        %v1146 = vadd.f32 %v647, %v1098
        %v1147 = vadd.f32 %v648, %v1101
        %v1148 = vadd.f32 %v649, %v1103
        %v1149 = vadd.f32 %v650, %v1106
        %v1150 = vadd.f32 %v651, %v1108
        %v1151 = vadd.f32 %v652, %v1111
        %v1152 = vadd.f32 %v653, %v1113
        %v1153 = vadd.f32 %v654, %v1116
        %v1154 = vadd.f32 %v655, %v1118
        %v1155 = vadd.f32 %v656, %v1121
        %v1156 = vadd.f32 %v657, %v1123
        %1157 = vst [vmem:[#allocation2] sm:$0xff] %v1125
        %1158 = vst [vmem:[#allocation2 + $0x8] sm:$0xff] %v1126
        %1159 = vst [vmem:[#allocation2 + $0x10] sm:$0xff] %v1127
        %1160 = vst [vmem:[#allocation2 + $0x18] sm:$0xff] %v1128
        %1161 = vst [vmem:[#allocation2 + $0x20] sm:$0xff] %v1129
        %1162 = vst [vmem:[#allocation2 + $0x28] sm:$0xff] %v1130
        %1163 = vst [vmem:[#allocation2 + $0x30] sm:$0xff] %v1131
        %1164 = vst [vmem:[#allocation2 + $0x38] sm:$0xff] %v1132
        %1165 = vst [vmem:[#allocation2 + $0x40] sm:$0xff] %v1133
        %1166 = vst [vmem:[#allocation2 + $0x48] sm:$0xff] %v1134
        %1167 = vst [vmem:[#allocation2 + $0x50] sm:$0xff] %v1135
        %1168 = vst [vmem:[#allocation2 + $0x58] sm:$0xff] %v1136
        %1169 = vst [vmem:[#allocation2 + $0x60] sm:$0xff] %v1137
        %1170 = vst [vmem:[#allocation2 + $0x68] sm:$0xff] %v1138
        %1171 = vst [vmem:[#allocation2 + $0x70] sm:$0xff] %v1139
        %1172 = vst [vmem:[#allocation2 + $0x78] sm:$0xff] %v1140
        %1173 = vst [vmem:[#allocation2 + $0x80] sm:$0xff] %v1141
        %1174 = vst [vmem:[#allocation2 + $0x88] sm:$0xff] %v1142
        %1175 = vst [vmem:[#allocation2 + $0x90] sm:$0xff] %v1143
        %1176 = vst [vmem:[#allocation2 + $0x98] sm:$0xff] %v1144
        %1177 = vst [vmem:[#allocation2 + $0xa0] sm:$0xff] %v1145
        %1178 = vst [vmem:[#allocation2 + $0xa8] sm:$0xff] %v1146
        %1179 = vst [vmem:[#allocation2 + $0xb0] sm:$0xff] %v1147
        %1180 = vst [vmem:[#allocation2 + $0xb8] sm:$0xff] %v1148
        %1181 = vst [vmem:[#allocation2 + $0xc0] sm:$0xff] %v1149
        %1182 = vst [vmem:[#allocation2 + $0xc8] sm:$0xff] %v1150
        %1183 = vst [vmem:[#allocation2 + $0xd0] sm:$0xff] %v1151
        %1184 = vst [vmem:[#allocation2 + $0xd8] sm:$0xff] %v1152
        %1185 = vst [vmem:[#allocation2 + $0xe0] sm:$0xff] %v1153
        %1186 = vst [vmem:[#allocation2 + $0xe8] sm:$0xff] %v1154
        %1187 = vst [vmem:[#allocation2 + $0xf0] sm:$0xff] %v1155
        %1188 = vst [vmem:[#allocation2 + $0xf8] sm:$0xff] %v1156
        %v1189 = vld [vmem:[%s542 + $0x10] sm:$0xff]
        %v1190 = vld [vmem:[%s542 + $0x18] sm:$0xff]
        %v1191 = vld [vmem:[%s542 + $0x20] sm:$0xff]
        %v1192 = vld [vmem:[%s542 + $0x28] sm:$0xff]
        %v1193 = vld [vmem:[%s542 + $0x30] sm:$0xff]
        %v1194 = vld [vmem:[%s542 + $0x38] sm:$0xff]
        %v1195 = vld [vmem:[%s542 + $0x40] sm:$0xff]
        %v1196 = vld [vmem:[%s542 + $0x48] sm:$0xff]
        %v1197 = vld [vmem:[%s542 + $0x50] sm:$0xff]
        %v1198 = vld [vmem:[%s542 + $0x58] sm:$0xff]
        %v1199 = vld [vmem:[%s542 + $0x60] sm:$0xff]
        %v1200 = vld [vmem:[%s542 + $0x68] sm:$0xff]
        %v1201 = vld [vmem:[%s542 + $0x70] sm:$0xff]
        %v1202 = vld [vmem:[%s542 + $0x78] sm:$0xff]
        %v1203 = vld [vmem:[%s542 + $0x80] sm:$0xff]
        %v1204 = vld [vmem:[%s542 + $0x88] sm:$0xff]
        %v1205 = vld [vmem:[%s542 + $0x90] sm:$0xff]
        %v1206 = vld [vmem:[%s542 + $0x98] sm:$0xff]
        %v1207 = vld [vmem:[%s542 + $0xa0] sm:$0xff]
        %v1208 = vld [vmem:[%s542 + $0xa8] sm:$0xff]
        %v1209 = vld [vmem:[%s542 + $0xb0] sm:$0xff]
        %v1210 = vld [vmem:[%s542 + $0xb8] sm:$0xff]
        %v1211 = vld [vmem:[%s542 + $0xc0] sm:$0xff]
        %v1212 = vld [vmem:[%s542 + $0xc8] sm:$0xff]
        %v1213 = vld [vmem:[%s542 + $0xd0] sm:$0xff]
        %v1214 = vld [vmem:[%s542 + $0xd8] sm:$0xff]
        %v1215 = vld [vmem:[%s542 + $0xe0] sm:$0xff]
        %v1216 = vld [vmem:[%s542 + $0xe8] sm:$0xff]
        %v1217 = vld [vmem:[%s542 + $0xf0] sm:$0xff]
        %v1218 = vld [vmem:[%s542 + $0xf8] sm:$0xff]
        %v1219 = vld [vmem:[%s542 + $0x100] sm:$0xff]
        %v1220 = vld [vmem:[%s542 + $0x108] sm:$0xff]
        %v1221 = vld [vmem:[#allocation2] sm:$0xff]
        %v1222 = vld [vmem:[#allocation2 + $0x8] sm:$0xff]
        %v1223 = vld [vmem:[#allocation2 + $0x10] sm:$0xff]
        %v1224 = vld [vmem:[#allocation2 + $0x18] sm:$0xff]
        %v1225 = vld [vmem:[#allocation2 + $0x20] sm:$0xff]
        %v1226 = vld [vmem:[#allocation2 + $0x28] sm:$0xff]
        %v1227 = vld [vmem:[#allocation2 + $0x30] sm:$0xff]
        %v1228 = vld [vmem:[#allocation2 + $0x38] sm:$0xff]
        %v1229 = vld [vmem:[#allocation2 + $0x40] sm:$0xff]
        %v1230 = vld [vmem:[#allocation2 + $0x48] sm:$0xff]
        %v1231 = vld [vmem:[#allocation2 + $0x50] sm:$0xff]
        %v1232 = vld [vmem:[#allocation2 + $0x58] sm:$0xff]
        %v1233 = vld [vmem:[#allocation2 + $0x60] sm:$0xff]
        %v1234 = vld [vmem:[#allocation2 + $0x68] sm:$0xff]
        %v1235 = vld [vmem:[#allocation2 + $0x70] sm:$0xff]
        %v1236 = vld [vmem:[#allocation2 + $0x78] sm:$0xff]
        %v1237 = vld [vmem:[#allocation2 + $0x80] sm:$0xff]
        %v1238 = vld [vmem:[#allocation2 + $0x88] sm:$0xff]
        %v1239 = vld [vmem:[#allocation2 + $0x90] sm:$0xff]
        %v1240 = vld [vmem:[#allocation2 + $0x98] sm:$0xff]
        %v1241 = vld [vmem:[#allocation2 + $0xa0] sm:$0xff]
        %v1242 = vld [vmem:[#allocation2 + $0xa8] sm:$0xff]
        %v1243 = vld [vmem:[#allocation2 + $0xb0] sm:$0xff]
        %v1244 = vld [vmem:[#allocation2 + $0xb8] sm:$0xff]
        %v1245 = vld [vmem:[#allocation2 + $0xc0] sm:$0xff]
        %v1246 = vld [vmem:[#allocation2 + $0xc8] sm:$0xff]
        %v1247 = vld [vmem:[#allocation2 + $0xd0] sm:$0xff]
        %v1248 = vld [vmem:[#allocation2 + $0xd8] sm:$0xff]
        %v1249 = vld [vmem:[#allocation2 + $0xe0] sm:$0xff]
        %v1250 = vld [vmem:[#allocation2 + $0xe8] sm:$0xff]
        %v1251 = vld [vmem:[#allocation2 + $0xf0] sm:$0xff]
        %v1252 = vld [vmem:[#allocation2 + $0xf8] sm:$0xff]
        %s1253 = scalar_lea.vmem %s504, 96 [#allocation3]
        %v1254 = vld [vmem:[%s1253] sm:$0xf]
        %v1255 = vld [vmem:[%s1253 + $0x4] sm:$0xf]
        %v1256 = vld [vmem:[%s1253 + $0x8] sm:$0xf]
        %v1257 = vld [vmem:[%s1253 + $0xc] sm:$0xf]
        %v1258 = vld [vmem:[%s1253 + $0x10] sm:$0xf]
        %v1259 = vld [vmem:[%s1253 + $0x14] sm:$0xf]
        %v1260 = vld [vmem:[%s1253 + $0x18] sm:$0xf]
        %v1261 = vld [vmem:[%s1253 + $0x1c] sm:$0xf]
        %v1262 = vld [vmem:[%s1253 + $0x20] sm:$0xf]
        %v1263 = vld [vmem:[%s1253 + $0x24] sm:$0xf]
        %v1264 = vld [vmem:[%s1253 + $0x28] sm:$0xf]
        %v1265 = vld [vmem:[%s1253 + $0x2c] sm:$0xf]
        %v1266 = vld [vmem:[%s1253 + $0x30] sm:$0xf]
        %v1267 = vld [vmem:[%s1253 + $0x34] sm:$0xf]
        %v1268 = vld [vmem:[%s1253 + $0x38] sm:$0xf]
        %v1269 = vld [vmem:[%s1253 + $0x3c] sm:$0xf]
        %v1270 = vld [vmem:[%s1253 + $0x40] sm:$0xf]
        %v1271 = vld [vmem:[%s1253 + $0x44] sm:$0xf]
        %v1272 = vld [vmem:[%s1253 + $0x48] sm:$0xf]
        %v1273 = vld [vmem:[%s1253 + $0x4c] sm:$0xf]
        %v1274 = vld [vmem:[%s1253 + $0x50] sm:$0xf]
        %v1275 = vld [vmem:[%s1253 + $0x54] sm:$0xf]
        %v1276 = vld [vmem:[%s1253 + $0x58] sm:$0xf]
        %v1277 = vld [vmem:[%s1253 + $0x5c] sm:$0xf]
        %v1310 = vunpack.c.l.b16 %v1189
        %v1311 = vunpack.c.h.b16 %v1189
        %v1312 = vunpack.c.l.b16 %v1190
        %v1313 = vunpack.c.h.b16 %v1190
        %v1314 = vunpack.c.l.b16 %v1191
        %v1315 = vunpack.c.h.b16 %v1191
        %v1316 = vunpack.c.l.b16 %v1192
        %v1317 = vunpack.c.h.b16 %v1192
        %v1318 = vunpack.c.l.b16 %v1193
        %v1319 = vunpack.c.h.b16 %v1193
        %v1320 = vunpack.c.l.b16 %v1194
        %v1321 = vunpack.c.h.b16 %v1194
        %v1322 = vunpack.c.l.b16 %v1195
        %v1323 = vunpack.c.h.b16 %v1195
        %v1324 = vunpack.c.l.b16 %v1196
        %v1325 = vunpack.c.h.b16 %v1196
        %v1326 = vunpack.c.l.b16 %v1197
        %v1327 = vunpack.c.h.b16 %v1197
        %v1328 = vunpack.c.l.b16 %v1198
        %v1329 = vunpack.c.h.b16 %v1198
        %v1330 = vunpack.c.l.b16 %v1199
        %v1331 = vunpack.c.h.b16 %v1199
        %v1332 = vunpack.c.l.b16 %v1200
        %v1333 = vunpack.c.h.b16 %v1200
        %v1334 = vunpack.c.l.b16 %v1201
        %v1335 = vunpack.c.h.b16 %v1201
        %v1336 = vunpack.c.l.b16 %v1202
        %v1337 = vunpack.c.h.b16 %v1202
        %v1338 = vunpack.c.l.b16 %v1203
        %v1339 = vunpack.c.h.b16 %v1203
        %v1340 = vunpack.c.l.b16 %v1204
        %v1341 = vunpack.c.h.b16 %v1204
        %v1342 = vunpack.c.l.b16 %v1205
        %v1343 = vunpack.c.h.b16 %v1205
        %v1344 = vunpack.c.l.b16 %v1206
        %v1345 = vunpack.c.h.b16 %v1206
        %v1346 = vunpack.c.l.b16 %v1207
        %v1347 = vunpack.c.h.b16 %v1207
        %v1348 = vunpack.c.l.b16 %v1208
        %v1349 = vunpack.c.h.b16 %v1208
        %v1350 = vunpack.c.l.b16 %v1209
        %v1351 = vunpack.c.h.b16 %v1209
        %v1352 = vunpack.c.l.b16 %v1210
        %v1353 = vunpack.c.h.b16 %v1210
        %v1354 = vunpack.c.l.b16 %v1211
        %v1355 = vunpack.c.h.b16 %v1211
        %v1356 = vunpack.c.l.b16 %v1212
        %v1357 = vunpack.c.h.b16 %v1212
        %v1358 = vunpack.c.l.b16 %v1213
        %v1359 = vunpack.c.h.b16 %v1213
        %v1360 = vunpack.c.l.b16 %v1214
        %v1361 = vunpack.c.h.b16 %v1214
        %v1362 = vunpack.c.l.b16 %v1215
        %v1363 = vunpack.c.h.b16 %v1215
        %v1364 = vunpack.c.l.b16 %v1216
        %v1365 = vunpack.c.h.b16 %v1216
        %v1366 = vunpack.c.l.b16 %v1217
        %v1367 = vunpack.c.h.b16 %v1217
        %v1368 = vunpack.c.l.b16 %v1218
        %v1369 = vunpack.c.h.b16 %v1218
        %v1370 = vunpack.c.l.b16 %v1219
        %v1371 = vunpack.c.h.b16 %v1219
        %v1372 = vunpack.c.l.b16 %v1220
        %v1373 = vunpack.c.h.b16 %v1220
        %v1374 = vpack.c.b16 %v1312, %v1310
        %v1375 = vpack.c.b16 %v1313, %v1311
        %v1376 = vpack.c.b16 %v1316, %v1314
        %v1377 = vpack.c.b16 %v1317, %v1315
        %v1378 = vpack.c.b16 %v1320, %v1318
        %v1379 = vpack.c.b16 %v1321, %v1319
        %v1380 = vpack.c.b16 %v1324, %v1322
        %v1381 = vpack.c.b16 %v1325, %v1323
        %v1382 = vpack.c.b16 %v1328, %v1326
        %v1383 = vpack.c.b16 %v1329, %v1327
        %v1384 = vpack.c.b16 %v1332, %v1330
        %v1385 = vpack.c.b16 %v1333, %v1331
        %v1386 = vpack.c.b16 %v1336, %v1334
        %v1387 = vpack.c.b16 %v1337, %v1335
        %v1388 = vpack.c.b16 %v1340, %v1338
        %v1389 = vpack.c.b16 %v1341, %v1339
        %v1390 = vpack.c.b16 %v1344, %v1342
        %v1391 = vpack.c.b16 %v1345, %v1343
        %v1392 = vpack.c.b16 %v1348, %v1346
        %v1393 = vpack.c.b16 %v1349, %v1347
        %v1394 = vpack.c.b16 %v1352, %v1350
        %v1395 = vpack.c.b16 %v1353, %v1351
        %v1396 = vpack.c.b16 %v1356, %v1354
        %v1397 = vpack.c.b16 %v1357, %v1355
        %v1398 = vpack.c.b16 %v1360, %v1358
        %v1399 = vpack.c.b16 %v1361, %v1359
        %v1400 = vpack.c.b16 %v1364, %v1362
        %v1401 = vpack.c.b16 %v1365, %v1363
        %v1402 = vpack.c.b16 %v1368, %v1366
        %v1403 = vpack.c.b16 %v1369, %v1367
        %v1404 = vpack.c.b16 %v1372, %v1370
        %v1405 = vpack.c.b16 %v1373, %v1371
        %v1446 = vunpack.c.l.b16 %v1254
        %v1447 = vunpack.c.l.b16 %v1255
        %v1448 = vunpack.c.l.b16 %v1256
        %v1449 = vunpack.c.l.b16 %v1257
        %v1450 = vunpack.c.l.b16 %v1258
        %v1451 = vunpack.c.l.b16 %v1259
        %v1452 = vunpack.c.l.b16 %v1260
        %v1453 = vunpack.c.l.b16 %v1261
        %v1454 = vunpack.c.l.b16 %v1262
        %v1455 = vunpack.c.l.b16 %v1263
        %v1456 = vunpack.c.l.b16 %v1264
        %v1457 = vunpack.c.l.b16 %v1265
        %v1458 = vunpack.c.l.b16 %v1266
        %v1459 = vunpack.c.l.b16 %v1267
        %v1460 = vunpack.c.l.b16 %v1268
        %v1461 = vunpack.c.l.b16 %v1269
        %v1462 = vunpack.c.l.b16 %v1270
        %v1463 = vunpack.c.l.b16 %v1271
        %v1464 = vunpack.c.l.b16 %v1272
        %v1465 = vunpack.c.l.b16 %v1273
        %v1466 = vunpack.c.l.b16 %v1274
        %v1467 = vunpack.c.l.b16 %v1275
        %v1468 = vunpack.c.l.b16 %v1276
        %v1469 = vunpack.c.l.b16 %v1277
        %v1470 = vpack.c.b16 %v1447, %v1446
        %v1471 = vpack.c.b16 %v1449, %v1448
        %v1472 = vpack.c.b16 %v1451, %v1450
        %v1473 = vpack.c.b16 %v1453, %v1452
        %v1474 = vpack.c.b16 %v1455, %v1454
        %v1475 = vpack.c.b16 %v1457, %v1456
        %v1476 = vpack.c.b16 %v1459, %v1458
        %v1477 = vpack.c.b16 %v1461, %v1460
        %v1478 = vpack.c.b16 %v1463, %v1462
        %v1479 = vpack.c.b16 %v1465, %v1464
        %v1480 = vpack.c.b16 %v1467, %v1466
        %v1481 = vpack.c.b16 %v1469, %v1468
        %v1495 = vsel %vm898, %v1375, 0
        %v1498 = vsel %vm898, %v1377, 0
        %v1501 = vsel %vm898, %v1379, 0
        %v1504 = vsel %vm898, %v1381, 0
        %v1507 = vsel %vm898, %v1383, 0
        %v1510 = vsel %vm898, %v1385, 0
        %v1513 = vsel %vm898, %v1387, 0
        %v1516 = vsel %vm898, %v1389, 0
        %v1519 = vsel %vm898, %v1391, 0
        %v1522 = vsel %vm898, %v1393, 0
        %v1525 = vsel %vm898, %v1395, 0
        %v1528 = vsel %vm898, %v1397, 0
        %v1531 = vsel %vm898, %v1399, 0
        %v1534 = vsel %vm898, %v1401, 0
        %v1537 = vsel %vm898, %v1403, 0
        %v1540 = vsel %vm898, %v1405, 0
        %1542 = vmatpush.bf16.msra.mxu0 %v1477
        %1543 = vmatpush.bf16.msra.mxu0 %v1476
        %1544 = vmatpush.bf16.msra.mxu0 %v1475
        %1545 = vmatpush.bf16.msra.mxu0 %v1474
        %1546 = vmatpush.bf16.msra.mxu0 %v1473
        %1547 = vmatpush.bf16.msra.mxu0 %v1472
        %1548 = vmatpush.bf16.msra.mxu0 %v1471
        %1549 = vmatpush.bf16.msra.mxu0 %v1470
        %1550 = vmatmul.bf16.gmra.mxu0 %v1374
        %v1551 = vpop.f32.mrf.mxu0
        %v1552 = vadd.f32 0.0, %v1551
        %v1553 = vpop.f32.mrf.mxu0
        %v1554 = vadd.f32 0.0, %v1553
        %1555 = vmatmul.bf16.gmra.mxu0 %v1376
        %v1556 = vpop.f32.mrf.mxu0
        %v1557 = vadd.f32 0.0, %v1556
        %v1558 = vpop.f32.mrf.mxu0
        %v1559 = vadd.f32 0.0, %v1558
        %1560 = vmatmul.bf16.gmra.mxu0 %v1378
        %v1561 = vpop.f32.mrf.mxu0
        %v1562 = vadd.f32 0.0, %v1561
        %v1563 = vpop.f32.mrf.mxu0
        %v1564 = vadd.f32 0.0, %v1563
        %1565 = vmatmul.bf16.gmra.mxu0 %v1380
        %v1566 = vpop.f32.mrf.mxu0
        %v1567 = vadd.f32 0.0, %v1566
        %v1568 = vpop.f32.mrf.mxu0
        %v1569 = vadd.f32 0.0, %v1568
        %1570 = vmatmul.bf16.gmra.mxu0 %v1382
        %v1571 = vpop.f32.mrf.mxu0
        %v1572 = vadd.f32 0.0, %v1571
        %v1573 = vpop.f32.mrf.mxu0
        %v1574 = vadd.f32 0.0, %v1573
        %1575 = vmatmul.bf16.gmra.mxu0 %v1384
        %v1576 = vpop.f32.mrf.mxu0
        %v1577 = vadd.f32 0.0, %v1576
        %v1578 = vpop.f32.mrf.mxu0
        %v1579 = vadd.f32 0.0, %v1578
        %1580 = vmatmul.bf16.gmra.mxu0 %v1386
        %v1581 = vpop.f32.mrf.mxu0
        %v1582 = vadd.f32 0.0, %v1581
        %v1583 = vpop.f32.mrf.mxu0
        %v1584 = vadd.f32 0.0, %v1583
        %1585 = vmatmul.bf16.gmra.mxu0 %v1388
        %v1586 = vpop.f32.mrf.mxu0
        %v1587 = vadd.f32 0.0, %v1586
        %v1588 = vpop.f32.mrf.mxu0
        %v1589 = vadd.f32 0.0, %v1588
        %1590 = vmatmul.bf16.gmra.mxu0 %v1390
        %v1591 = vpop.f32.mrf.mxu0
        %v1592 = vadd.f32 0.0, %v1591
        %v1593 = vpop.f32.mrf.mxu0
        %v1594 = vadd.f32 0.0, %v1593
        %1595 = vmatmul.bf16.gmra.mxu0 %v1392
        %v1596 = vpop.f32.mrf.mxu0
        %v1597 = vadd.f32 0.0, %v1596
        %v1598 = vpop.f32.mrf.mxu0
        %v1599 = vadd.f32 0.0, %v1598
        %1600 = vmatmul.bf16.gmra.mxu0 %v1394
        %v1601 = vpop.f32.mrf.mxu0
        %v1602 = vadd.f32 0.0, %v1601
        %v1603 = vpop.f32.mrf.mxu0
        %v1604 = vadd.f32 0.0, %v1603
        %1605 = vmatmul.bf16.gmra.mxu0 %v1396
        %v1606 = vpop.f32.mrf.mxu0
        %v1607 = vadd.f32 0.0, %v1606
        %v1608 = vpop.f32.mrf.mxu0
        %v1609 = vadd.f32 0.0, %v1608
        %1610 = vmatmul.bf16.gmra.mxu0 %v1398
        %v1611 = vpop.f32.mrf.mxu0
        %v1612 = vadd.f32 0.0, %v1611
        %v1613 = vpop.f32.mrf.mxu0
        %v1614 = vadd.f32 0.0, %v1613
        %1615 = vmatmul.bf16.gmra.mxu0 %v1400
        %v1616 = vpop.f32.mrf.mxu0
        %v1617 = vadd.f32 0.0, %v1616
        %v1618 = vpop.f32.mrf.mxu0
        %v1619 = vadd.f32 0.0, %v1618
        %1620 = vmatmul.bf16.gmra.mxu0 %v1402
        %v1621 = vpop.f32.mrf.mxu0
        %v1622 = vadd.f32 0.0, %v1621
        %v1623 = vpop.f32.mrf.mxu0
        %v1624 = vadd.f32 0.0, %v1623
        %1625 = vmatmul.bf16.gmra.mxu0 %v1404
        %v1626 = vpop.f32.mrf.mxu0
        %v1627 = vadd.f32 0.0, %v1626
        %v1628 = vpop.f32.mrf.mxu0
        %v1629 = vadd.f32 0.0, %v1628
        %1630 = vdwg.mxu0
        %1631 = vmatpush.bf16.msra.mxu0 0
        %1632 = vmatpush.bf16.msra.mxu0 0
        %1633 = vmatpush.bf16.msra.mxu0 0
        %1634 = vmatpush.bf16.msra.mxu0 0
        %1635 = vmatpush.bf16.msra.mxu0 %v1481
        %1636 = vmatpush.bf16.msra.mxu0 %v1480
        %1637 = vmatpush.bf16.msra.mxu0 %v1479
        %1638 = vmatpush.bf16.msra.mxu0 %v1478
        %1639 = vmatmul.bf16.gmra.mxu0 %v1495
        %v1640 = vpop.f32.mrf.mxu0
        %v1641 = vadd.f32 %v1552, %v1640
        %v1642 = vpop.f32.mrf.mxu0
        %v1643 = vadd.f32 %v1554, %v1642
        %1644 = vmatmul.bf16.gmra.mxu0 %v1498
        %v1645 = vpop.f32.mrf.mxu0
        %v1646 = vadd.f32 %v1557, %v1645
        %v1647 = vpop.f32.mrf.mxu0
        %v1648 = vadd.f32 %v1559, %v1647
        %1649 = vmatmul.bf16.gmra.mxu0 %v1501
        %v1650 = vpop.f32.mrf.mxu0
        %v1651 = vadd.f32 %v1562, %v1650
        %v1652 = vpop.f32.mrf.mxu0
        %v1653 = vadd.f32 %v1564, %v1652
        %1654 = vmatmul.bf16.gmra.mxu0 %v1504
        %v1655 = vpop.f32.mrf.mxu0
        %v1656 = vadd.f32 %v1567, %v1655
        %v1657 = vpop.f32.mrf.mxu0
        %v1658 = vadd.f32 %v1569, %v1657
        %1659 = vmatmul.bf16.gmra.mxu0 %v1507
        %v1660 = vpop.f32.mrf.mxu0
        %v1661 = vadd.f32 %v1572, %v1660
        %v1662 = vpop.f32.mrf.mxu0
        %v1663 = vadd.f32 %v1574, %v1662
        %1664 = vmatmul.bf16.gmra.mxu0 %v1510
        %v1665 = vpop.f32.mrf.mxu0
        %v1666 = vadd.f32 %v1577, %v1665
        %v1667 = vpop.f32.mrf.mxu0
        %v1668 = vadd.f32 %v1579, %v1667
        %1669 = vmatmul.bf16.gmra.mxu0 %v1513
        %v1670 = vpop.f32.mrf.mxu0
        %v1671 = vadd.f32 %v1582, %v1670
        %v1672 = vpop.f32.mrf.mxu0
        %v1673 = vadd.f32 %v1584, %v1672
        %1674 = vmatmul.bf16.gmra.mxu0 %v1516
        %v1675 = vpop.f32.mrf.mxu0
        %v1676 = vadd.f32 %v1587, %v1675
        %v1677 = vpop.f32.mrf.mxu0
        %v1678 = vadd.f32 %v1589, %v1677
        %1679 = vmatmul.bf16.gmra.mxu0 %v1519
        %v1680 = vpop.f32.mrf.mxu0
        %v1681 = vadd.f32 %v1592, %v1680
        %v1682 = vpop.f32.mrf.mxu0
        %v1683 = vadd.f32 %v1594, %v1682
        %1684 = vmatmul.bf16.gmra.mxu0 %v1522
        %v1685 = vpop.f32.mrf.mxu0
        %v1686 = vadd.f32 %v1597, %v1685
        %v1687 = vpop.f32.mrf.mxu0
        %v1688 = vadd.f32 %v1599, %v1687
        %1689 = vmatmul.bf16.gmra.mxu0 %v1525
        %v1690 = vpop.f32.mrf.mxu0
        %v1691 = vadd.f32 %v1602, %v1690
        %v1692 = vpop.f32.mrf.mxu0
        %v1693 = vadd.f32 %v1604, %v1692
        %1694 = vmatmul.bf16.gmra.mxu0 %v1528
        %v1695 = vpop.f32.mrf.mxu0
        %v1696 = vadd.f32 %v1607, %v1695
        %v1697 = vpop.f32.mrf.mxu0
        %v1698 = vadd.f32 %v1609, %v1697
        %1699 = vmatmul.bf16.gmra.mxu0 %v1531
        %v1700 = vpop.f32.mrf.mxu0
        %v1701 = vadd.f32 %v1612, %v1700
        %v1702 = vpop.f32.mrf.mxu0
        %v1703 = vadd.f32 %v1614, %v1702
        %1704 = vmatmul.bf16.gmra.mxu0 %v1534
        %v1705 = vpop.f32.mrf.mxu0
        %v1706 = vadd.f32 %v1617, %v1705
        %v1707 = vpop.f32.mrf.mxu0
        %v1708 = vadd.f32 %v1619, %v1707
        %1709 = vmatmul.bf16.gmra.mxu0 %v1537
        %v1710 = vpop.f32.mrf.mxu0
        %v1711 = vadd.f32 %v1622, %v1710
        %v1712 = vpop.f32.mrf.mxu0
        %v1713 = vadd.f32 %v1624, %v1712
        %1714 = vmatmul.bf16.gmra.mxu0 %v1540
        %v1715 = vpop.f32.mrf.mxu0
        %v1716 = vadd.f32 %v1627, %v1715
        %v1717 = vpop.f32.mrf.mxu0
        %v1718 = vadd.f32 %v1629, %v1717
        %1719 = vdwg.mxu0
        %v1720 = vadd.f32 %v1221, %v1641
        %v1721 = vadd.f32 %v1222, %v1643
        %v1722 = vadd.f32 %v1223, %v1646
        %v1723 = vadd.f32 %v1224, %v1648
        %v1724 = vadd.f32 %v1225, %v1651
        %v1725 = vadd.f32 %v1226, %v1653
        %v1726 = vadd.f32 %v1227, %v1656
        %v1727 = vadd.f32 %v1228, %v1658
        %v1728 = vadd.f32 %v1229, %v1661
        %v1729 = vadd.f32 %v1230, %v1663
        %v1730 = vadd.f32 %v1231, %v1666
        %v1731 = vadd.f32 %v1232, %v1668
        %v1732 = vadd.f32 %v1233, %v1671
        %v1733 = vadd.f32 %v1234, %v1673
        %v1734 = vadd.f32 %v1235, %v1676
        %v1735 = vadd.f32 %v1236, %v1678
        %v1736 = vadd.f32 %v1237, %v1681
        %v1737 = vadd.f32 %v1238, %v1683
        %v1738 = vadd.f32 %v1239, %v1686
        %v1739 = vadd.f32 %v1240, %v1688
        %v1740 = vadd.f32 %v1241, %v1691
        %v1741 = vadd.f32 %v1242, %v1693
        %v1742 = vadd.f32 %v1243, %v1696
        %v1743 = vadd.f32 %v1244, %v1698
        %v1744 = vadd.f32 %v1245, %v1701
        %v1745 = vadd.f32 %v1246, %v1703
        %v1746 = vadd.f32 %v1247, %v1706
        %v1747 = vadd.f32 %v1248, %v1708
        %v1748 = vadd.f32 %v1249, %v1711
        %v1749 = vadd.f32 %v1250, %v1713
        %v1750 = vadd.f32 %v1251, %v1716
        %v1751 = vadd.f32 %v1252, %v1718
        %1752 = vst [vmem:[#allocation2] sm:$0xff] %v1720
        %1753 = vst [vmem:[#allocation2 + $0x8] sm:$0xff] %v1721
        %1754 = vst [vmem:[#allocation2 + $0x10] sm:$0xff] %v1722
        %1755 = vst [vmem:[#allocation2 + $0x18] sm:$0xff] %v1723
        %1756 = vst [vmem:[#allocation2 + $0x20] sm:$0xff] %v1724
        %1757 = vst [vmem:[#allocation2 + $0x28] sm:$0xff] %v1725
        %1758 = vst [vmem:[#allocation2 + $0x30] sm:$0xff] %v1726
        %1759 = vst [vmem:[#allocation2 + $0x38] sm:$0xff] %v1727
        %1760 = vst [vmem:[#allocation2 + $0x40] sm:$0xff] %v1728
        %1761 = vst [vmem:[#allocation2 + $0x48] sm:$0xff] %v1729
        %1762 = vst [vmem:[#allocation2 + $0x50] sm:$0xff] %v1730
        %1763 = vst [vmem:[#allocation2 + $0x58] sm:$0xff] %v1731
        %1764 = vst [vmem:[#allocation2 + $0x60] sm:$0xff] %v1732
        %1765 = vst [vmem:[#allocation2 + $0x68] sm:$0xff] %v1733
        %1766 = vst [vmem:[#allocation2 + $0x70] sm:$0xff] %v1734
        %1767 = vst [vmem:[#allocation2 + $0x78] sm:$0xff] %v1735
        %1768 = vst [vmem:[#allocation2 + $0x80] sm:$0xff] %v1736
        %1769 = vst [vmem:[#allocation2 + $0x88] sm:$0xff] %v1737
        %1770 = vst [vmem:[#allocation2 + $0x90] sm:$0xff] %v1738
        %1771 = vst [vmem:[#allocation2 + $0x98] sm:$0xff] %v1739
        %1772 = vst [vmem:[#allocation2 + $0xa0] sm:$0xff] %v1740
        %1773 = vst [vmem:[#allocation2 + $0xa8] sm:$0xff] %v1741
        %1774 = vst [vmem:[#allocation2 + $0xb0] sm:$0xff] %v1742
        %1775 = vst [vmem:[#allocation2 + $0xb8] sm:$0xff] %v1743
        %1776 = vst [vmem:[#allocation2 + $0xc0] sm:$0xff] %v1744
        %1777 = vst [vmem:[#allocation2 + $0xc8] sm:$0xff] %v1745
        %1778 = vst [vmem:[#allocation2 + $0xd0] sm:$0xff] %v1746
        %1779 = vst [vmem:[#allocation2 + $0xd8] sm:$0xff] %v1747
        %1780 = vst [vmem:[#allocation2 + $0xe0] sm:$0xff] %v1748
        %1781 = vst [vmem:[#allocation2 + $0xe8] sm:$0xff] %v1749
        %1782 = vst [vmem:[#allocation2 + $0xf0] sm:$0xff] %v1750
        %1783 = vst [vmem:[#allocation2 + $0xf8] sm:$0xff] %v1751
        %v1784 = vld [vmem:[%s542 + $0x20] sm:$0xff]
        %v1785 = vld [vmem:[%s542 + $0x28] sm:$0xff]
        %v1786 = vld [vmem:[%s542 + $0x30] sm:$0xff]
        %v1787 = vld [vmem:[%s542 + $0x38] sm:$0xff]
        %v1788 = vld [vmem:[%s542 + $0x40] sm:$0xff]
        %v1789 = vld [vmem:[%s542 + $0x48] sm:$0xff]
        %v1790 = vld [vmem:[%s542 + $0x50] sm:$0xff]
        %v1791 = vld [vmem:[%s542 + $0x58] sm:$0xff]
        %v1792 = vld [vmem:[%s542 + $0x60] sm:$0xff]
        %v1793 = vld [vmem:[%s542 + $0x68] sm:$0xff]
        %v1794 = vld [vmem:[%s542 + $0x70] sm:$0xff]
        %v1795 = vld [vmem:[%s542 + $0x78] sm:$0xff]
        %v1796 = vld [vmem:[%s542 + $0x80] sm:$0xff]
        %v1797 = vld [vmem:[%s542 + $0x88] sm:$0xff]
        %v1798 = vld [vmem:[%s542 + $0x90] sm:$0xff]
        %v1799 = vld [vmem:[%s542 + $0x98] sm:$0xff]
        %v1800 = vld [vmem:[%s542 + $0xa0] sm:$0xff]
        %v1801 = vld [vmem:[%s542 + $0xa8] sm:$0xff]
        %v1802 = vld [vmem:[%s542 + $0xb0] sm:$0xff]
        %v1803 = vld [vmem:[%s542 + $0xb8] sm:$0xff]
        %v1804 = vld [vmem:[%s542 + $0xc0] sm:$0xff]
        %v1805 = vld [vmem:[%s542 + $0xc8] sm:$0xff]
        %v1806 = vld [vmem:[%s542 + $0xd0] sm:$0xff]
        %v1807 = vld [vmem:[%s542 + $0xd8] sm:$0xff]
        %v1808 = vld [vmem:[%s542 + $0xe0] sm:$0xff]
        %v1809 = vld [vmem:[%s542 + $0xe8] sm:$0xff]
        %v1810 = vld [vmem:[%s542 + $0xf0] sm:$0xff]
        %v1811 = vld [vmem:[%s542 + $0xf8] sm:$0xff]
        %v1812 = vld [vmem:[%s542 + $0x100] sm:$0xff]
        %v1813 = vld [vmem:[%s542 + $0x108] sm:$0xff]
        %v1814 = vld [vmem:[%s542 + $0x110] sm:$0xff]
        %v1815 = vld [vmem:[%s542 + $0x118] sm:$0xff]
        %v1816 = vld [vmem:[#allocation2] sm:$0xff]
        %v1817 = vld [vmem:[#allocation2 + $0x8] sm:$0xff]
        %v1818 = vld [vmem:[#allocation2 + $0x10] sm:$0xff]
        %v1819 = vld [vmem:[#allocation2 + $0x18] sm:$0xff]
        %v1820 = vld [vmem:[#allocation2 + $0x20] sm:$0xff]
        %v1821 = vld [vmem:[#allocation2 + $0x28] sm:$0xff]
        %v1822 = vld [vmem:[#allocation2 + $0x30] sm:$0xff]
        %v1823 = vld [vmem:[#allocation2 + $0x38] sm:$0xff]
        %v1824 = vld [vmem:[#allocation2 + $0x40] sm:$0xff]
        %v1825 = vld [vmem:[#allocation2 + $0x48] sm:$0xff]
        %v1826 = vld [vmem:[#allocation2 + $0x50] sm:$0xff]
        %v1827 = vld [vmem:[#allocation2 + $0x58] sm:$0xff]
        %v1828 = vld [vmem:[#allocation2 + $0x60] sm:$0xff]
        %v1829 = vld [vmem:[#allocation2 + $0x68] sm:$0xff]
        %v1830 = vld [vmem:[#allocation2 + $0x70] sm:$0xff]
        %v1831 = vld [vmem:[#allocation2 + $0x78] sm:$0xff]
        %v1832 = vld [vmem:[#allocation2 + $0x80] sm:$0xff]
        %v1833 = vld [vmem:[#allocation2 + $0x88] sm:$0xff]
        %v1834 = vld [vmem:[#allocation2 + $0x90] sm:$0xff]
        %v1835 = vld [vmem:[#allocation2 + $0x98] sm:$0xff]
        %v1836 = vld [vmem:[#allocation2 + $0xa0] sm:$0xff]
        %v1837 = vld [vmem:[#allocation2 + $0xa8] sm:$0xff]
        %v1838 = vld [vmem:[#allocation2 + $0xb0] sm:$0xff]
        %v1839 = vld [vmem:[#allocation2 + $0xb8] sm:$0xff]
        %v1840 = vld [vmem:[#allocation2 + $0xc0] sm:$0xff]
        %v1841 = vld [vmem:[#allocation2 + $0xc8] sm:$0xff]
        %v1842 = vld [vmem:[#allocation2 + $0xd0] sm:$0xff]
        %v1843 = vld [vmem:[#allocation2 + $0xd8] sm:$0xff]
        %v1844 = vld [vmem:[#allocation2 + $0xe0] sm:$0xff]
        %v1845 = vld [vmem:[#allocation2 + $0xe8] sm:$0xff]
        %v1846 = vld [vmem:[#allocation2 + $0xf0] sm:$0xff]
        %v1847 = vld [vmem:[#allocation2 + $0xf8] sm:$0xff]
        %s1848 = scalar_lea.vmem %s504, 192 [#allocation3]
        %v1849 = vld [vmem:[%s1848] sm:$0xf]
        %v1850 = vld [vmem:[%s1848 + $0x4] sm:$0xf]
        %v1851 = vld [vmem:[%s1848 + $0x8] sm:$0xf]
        %v1852 = vld [vmem:[%s1848 + $0xc] sm:$0xf]
        %v1853 = vld [vmem:[%s1848 + $0x10] sm:$0xf]
        %v1854 = vld [vmem:[%s1848 + $0x14] sm:$0xf]
        %v1855 = vld [vmem:[%s1848 + $0x18] sm:$0xf]
        %v1856 = vld [vmem:[%s1848 + $0x1c] sm:$0xf]
        %v1857 = vld [vmem:[%s1848 + $0x20] sm:$0xf]
        %v1858 = vld [vmem:[%s1848 + $0x24] sm:$0xf]
        %v1859 = vld [vmem:[%s1848 + $0x28] sm:$0xf]
        %v1860 = vld [vmem:[%s1848 + $0x2c] sm:$0xf]
        %v1861 = vld [vmem:[%s1848 + $0x30] sm:$0xf]
        %v1862 = vld [vmem:[%s1848 + $0x34] sm:$0xf]
        %v1863 = vld [vmem:[%s1848 + $0x38] sm:$0xf]
        %v1864 = vld [vmem:[%s1848 + $0x3c] sm:$0xf]
        %v1865 = vld [vmem:[%s1848 + $0x40] sm:$0xf]
        %v1866 = vld [vmem:[%s1848 + $0x44] sm:$0xf]
        %v1867 = vld [vmem:[%s1848 + $0x48] sm:$0xf]
        %v1868 = vld [vmem:[%s1848 + $0x4c] sm:$0xf]
        %v1869 = vld [vmem:[%s1848 + $0x50] sm:$0xf]
        %v1870 = vld [vmem:[%s1848 + $0x54] sm:$0xf]
        %v1871 = vld [vmem:[%s1848 + $0x58] sm:$0xf]
        %v1872 = vld [vmem:[%s1848 + $0x5c] sm:$0xf]
        %v1905 = vunpack.c.l.b16 %v1784
        %v1906 = vunpack.c.h.b16 %v1784
        %v1907 = vunpack.c.l.b16 %v1785
        %v1908 = vunpack.c.h.b16 %v1785
        %v1909 = vunpack.c.l.b16 %v1786
        %v1910 = vunpack.c.h.b16 %v1786
        %v1911 = vunpack.c.l.b16 %v1787
        %v1912 = vunpack.c.h.b16 %v1787
        %v1913 = vunpack.c.l.b16 %v1788
        %v1914 = vunpack.c.h.b16 %v1788
        %v1915 = vunpack.c.l.b16 %v1789
        %v1916 = vunpack.c.h.b16 %v1789
        %v1917 = vunpack.c.l.b16 %v1790
        %v1918 = vunpack.c.h.b16 %v1790
        %v1919 = vunpack.c.l.b16 %v1791
        %v1920 = vunpack.c.h.b16 %v1791
        %v1921 = vunpack.c.l.b16 %v1792
        %v1922 = vunpack.c.h.b16 %v1792
        %v1923 = vunpack.c.l.b16 %v1793
        %v1924 = vunpack.c.h.b16 %v1793
        %v1925 = vunpack.c.l.b16 %v1794
        %v1926 = vunpack.c.h.b16 %v1794
        %v1927 = vunpack.c.l.b16 %v1795
        %v1928 = vunpack.c.h.b16 %v1795
        %v1929 = vunpack.c.l.b16 %v1796
        %v1930 = vunpack.c.h.b16 %v1796
        %v1931 = vunpack.c.l.b16 %v1797
        %v1932 = vunpack.c.h.b16 %v1797
        %v1933 = vunpack.c.l.b16 %v1798
        %v1934 = vunpack.c.h.b16 %v1798
        %v1935 = vunpack.c.l.b16 %v1799
        %v1936 = vunpack.c.h.b16 %v1799
        %v1937 = vunpack.c.l.b16 %v1800
        %v1938 = vunpack.c.h.b16 %v1800
        %v1939 = vunpack.c.l.b16 %v1801
        %v1940 = vunpack.c.h.b16 %v1801
        %v1941 = vunpack.c.l.b16 %v1802
        %v1942 = vunpack.c.h.b16 %v1802
        %v1943 = vunpack.c.l.b16 %v1803
        %v1944 = vunpack.c.h.b16 %v1803
        %v1945 = vunpack.c.l.b16 %v1804
        %v1946 = vunpack.c.h.b16 %v1804
        %v1947 = vunpack.c.l.b16 %v1805
        %v1948 = vunpack.c.h.b16 %v1805
        %v1949 = vunpack.c.l.b16 %v1806
        %v1950 = vunpack.c.h.b16 %v1806
        %v1951 = vunpack.c.l.b16 %v1807
        %v1952 = vunpack.c.h.b16 %v1807
        %v1953 = vunpack.c.l.b16 %v1808
        %v1954 = vunpack.c.h.b16 %v1808
        %v1955 = vunpack.c.l.b16 %v1809
        %v1956 = vunpack.c.h.b16 %v1809
        %v1957 = vunpack.c.l.b16 %v1810
        %v1958 = vunpack.c.h.b16 %v1810
        %v1959 = vunpack.c.l.b16 %v1811
        %v1960 = vunpack.c.h.b16 %v1811
        %v1961 = vunpack.c.l.b16 %v1812
        %v1962 = vunpack.c.h.b16 %v1812
        %v1963 = vunpack.c.l.b16 %v1813
        %v1964 = vunpack.c.h.b16 %v1813
        %v1965 = vunpack.c.l.b16 %v1814
        %v1966 = vunpack.c.h.b16 %v1814
        %v1967 = vunpack.c.l.b16 %v1815
        %v1968 = vunpack.c.h.b16 %v1815
        %v1969 = vpack.c.b16 %v1907, %v1905
        %v1970 = vpack.c.b16 %v1908, %v1906
        %v1971 = vpack.c.b16 %v1911, %v1909
        %v1972 = vpack.c.b16 %v1912, %v1910
        %v1973 = vpack.c.b16 %v1915, %v1913
        %v1974 = vpack.c.b16 %v1916, %v1914
        %v1975 = vpack.c.b16 %v1919, %v1917
        %v1976 = vpack.c.b16 %v1920, %v1918
        %v1977 = vpack.c.b16 %v1923, %v1921
        %v1978 = vpack.c.b16 %v1924, %v1922
        %v1979 = vpack.c.b16 %v1927, %v1925
        %v1980 = vpack.c.b16 %v1928, %v1926
        %v1981 = vpack.c.b16 %v1931, %v1929
        %v1982 = vpack.c.b16 %v1932, %v1930
        %v1983 = vpack.c.b16 %v1935, %v1933
        %v1984 = vpack.c.b16 %v1936, %v1934
        %v1985 = vpack.c.b16 %v1939, %v1937
        %v1986 = vpack.c.b16 %v1940, %v1938
        %v1987 = vpack.c.b16 %v1943, %v1941
        %v1988 = vpack.c.b16 %v1944, %v1942
        %v1989 = vpack.c.b16 %v1947, %v1945
        %v1990 = vpack.c.b16 %v1948, %v1946
        %v1991 = vpack.c.b16 %v1951, %v1949
        %v1992 = vpack.c.b16 %v1952, %v1950
        %v1993 = vpack.c.b16 %v1955, %v1953
        %v1994 = vpack.c.b16 %v1956, %v1954
        %v1995 = vpack.c.b16 %v1959, %v1957
        %v1996 = vpack.c.b16 %v1960, %v1958
        %v1997 = vpack.c.b16 %v1963, %v1961
        %v1998 = vpack.c.b16 %v1964, %v1962
        %v1999 = vpack.c.b16 %v1967, %v1965
        %v2000 = vpack.c.b16 %v1968, %v1966
        %v2041 = vunpack.c.l.b16 %v1849
        %v2042 = vunpack.c.l.b16 %v1850
        %v2043 = vunpack.c.l.b16 %v1851
        %v2044 = vunpack.c.l.b16 %v1852
        %v2045 = vunpack.c.l.b16 %v1853
        %v2046 = vunpack.c.l.b16 %v1854
        %v2047 = vunpack.c.l.b16 %v1855
        %v2048 = vunpack.c.l.b16 %v1856
        %v2049 = vunpack.c.l.b16 %v1857
        %v2050 = vunpack.c.l.b16 %v1858
        %v2051 = vunpack.c.l.b16 %v1859
        %v2052 = vunpack.c.l.b16 %v1860
        %v2053 = vunpack.c.l.b16 %v1861
        %v2054 = vunpack.c.l.b16 %v1862
        %v2055 = vunpack.c.l.b16 %v1863
        %v2056 = vunpack.c.l.b16 %v1864
        %v2057 = vunpack.c.l.b16 %v1865
        %v2058 = vunpack.c.l.b16 %v1866
        %v2059 = vunpack.c.l.b16 %v1867
        %v2060 = vunpack.c.l.b16 %v1868
        %v2061 = vunpack.c.l.b16 %v1869
        %v2062 = vunpack.c.l.b16 %v1870
        %v2063 = vunpack.c.l.b16 %v1871
        %v2064 = vunpack.c.l.b16 %v1872
        %v2065 = vpack.c.b16 %v2042, %v2041
        %v2066 = vpack.c.b16 %v2044, %v2043
        %v2067 = vpack.c.b16 %v2046, %v2045
        %v2068 = vpack.c.b16 %v2048, %v2047
        %v2069 = vpack.c.b16 %v2050, %v2049
        %v2070 = vpack.c.b16 %v2052, %v2051
        %v2071 = vpack.c.b16 %v2054, %v2053
        %v2072 = vpack.c.b16 %v2056, %v2055
        %v2073 = vpack.c.b16 %v2058, %v2057
        %v2074 = vpack.c.b16 %v2060, %v2059
        %v2075 = vpack.c.b16 %v2062, %v2061
        %v2076 = vpack.c.b16 %v2064, %v2063
        %v2090 = vsel %vm898, %v1970, 0
        %v2093 = vsel %vm898, %v1972, 0
        %v2096 = vsel %vm898, %v1974, 0
        %v2099 = vsel %vm898, %v1976, 0
        %v2102 = vsel %vm898, %v1978, 0
        %v2105 = vsel %vm898, %v1980, 0
        %v2108 = vsel %vm898, %v1982, 0
        %v2111 = vsel %vm898, %v1984, 0
        %v2114 = vsel %vm898, %v1986, 0
        %v2117 = vsel %vm898, %v1988, 0
        %v2120 = vsel %vm898, %v1990, 0
        %v2123 = vsel %vm898, %v1992, 0
        %v2126 = vsel %vm898, %v1994, 0
        %v2129 = vsel %vm898, %v1996, 0
        %v2132 = vsel %vm898, %v1998, 0
        %v2135 = vsel %vm898, %v2000, 0
        %2137 = vmatpush.bf16.msra.mxu0 %v2072
        %2138 = vmatpush.bf16.msra.mxu0 %v2071
        %2139 = vmatpush.bf16.msra.mxu0 %v2070
        %2140 = vmatpush.bf16.msra.mxu0 %v2069
        %2141 = vmatpush.bf16.msra.mxu0 %v2068
        %2142 = vmatpush.bf16.msra.mxu0 %v2067
        %2143 = vmatpush.bf16.msra.mxu0 %v2066
        %2144 = vmatpush.bf16.msra.mxu0 %v2065
        %2145 = vmatmul.bf16.gmra.mxu0 %v1969
        %v2146 = vpop.f32.mrf.mxu0
        %v2147 = vadd.f32 0.0, %v2146
        %v2148 = vpop.f32.mrf.mxu0
        %v2149 = vadd.f32 0.0, %v2148
        %2150 = vmatmul.bf16.gmra.mxu0 %v1971
        %v2151 = vpop.f32.mrf.mxu0
        %v2152 = vadd.f32 0.0, %v2151
        %v2153 = vpop.f32.mrf.mxu0
        %v2154 = vadd.f32 0.0, %v2153
        %2155 = vmatmul.bf16.gmra.mxu0 %v1973
        %v2156 = vpop.f32.mrf.mxu0
        %v2157 = vadd.f32 0.0, %v2156
        %v2158 = vpop.f32.mrf.mxu0
        %v2159 = vadd.f32 0.0, %v2158
        %2160 = vmatmul.bf16.gmra.mxu0 %v1975
        %v2161 = vpop.f32.mrf.mxu0
        %v2162 = vadd.f32 0.0, %v2161
        %v2163 = vpop.f32.mrf.mxu0
        %v2164 = vadd.f32 0.0, %v2163
        %2165 = vmatmul.bf16.gmra.mxu0 %v1977
        %v2166 = vpop.f32.mrf.mxu0
        %v2167 = vadd.f32 0.0, %v2166
        %v2168 = vpop.f32.mrf.mxu0
        %v2169 = vadd.f32 0.0, %v2168
        %2170 = vmatmul.bf16.gmra.mxu0 %v1979
        %v2171 = vpop.f32.mrf.mxu0
        %v2172 = vadd.f32 0.0, %v2171
        %v2173 = vpop.f32.mrf.mxu0
        %v2174 = vadd.f32 0.0, %v2173
        %2175 = vmatmul.bf16.gmra.mxu0 %v1981
        %v2176 = vpop.f32.mrf.mxu0
        %v2177 = vadd.f32 0.0, %v2176
        %v2178 = vpop.f32.mrf.mxu0
        %v2179 = vadd.f32 0.0, %v2178
        %2180 = vmatmul.bf16.gmra.mxu0 %v1983
        %v2181 = vpop.f32.mrf.mxu0
        %v2182 = vadd.f32 0.0, %v2181
        %v2183 = vpop.f32.mrf.mxu0
        %v2184 = vadd.f32 0.0, %v2183
        %2185 = vmatmul.bf16.gmra.mxu0 %v1985
        %v2186 = vpop.f32.mrf.mxu0
        %v2187 = vadd.f32 0.0, %v2186
        %v2188 = vpop.f32.mrf.mxu0
        %v2189 = vadd.f32 0.0, %v2188
        %2190 = vmatmul.bf16.gmra.mxu0 %v1987
        %v2191 = vpop.f32.mrf.mxu0
        %v2192 = vadd.f32 0.0, %v2191
        %v2193 = vpop.f32.mrf.mxu0
        %v2194 = vadd.f32 0.0, %v2193
        %2195 = vmatmul.bf16.gmra.mxu0 %v1989
        %v2196 = vpop.f32.mrf.mxu0
        %v2197 = vadd.f32 0.0, %v2196
        %v2198 = vpop.f32.mrf.mxu0
        %v2199 = vadd.f32 0.0, %v2198
        %2200 = vmatmul.bf16.gmra.mxu0 %v1991
        %v2201 = vpop.f32.mrf.mxu0
        %v2202 = vadd.f32 0.0, %v2201
        %v2203 = vpop.f32.mrf.mxu0
        %v2204 = vadd.f32 0.0, %v2203
        %2205 = vmatmul.bf16.gmra.mxu0 %v1993
        %v2206 = vpop.f32.mrf.mxu0
        %v2207 = vadd.f32 0.0, %v2206
        %v2208 = vpop.f32.mrf.mxu0
        %v2209 = vadd.f32 0.0, %v2208
        %2210 = vmatmul.bf16.gmra.mxu0 %v1995
        %v2211 = vpop.f32.mrf.mxu0
        %v2212 = vadd.f32 0.0, %v2211
        %v2213 = vpop.f32.mrf.mxu0
        %v2214 = vadd.f32 0.0, %v2213
        %2215 = vmatmul.bf16.gmra.mxu0 %v1997
        %v2216 = vpop.f32.mrf.mxu0
        %v2217 = vadd.f32 0.0, %v2216
        %v2218 = vpop.f32.mrf.mxu0
        %v2219 = vadd.f32 0.0, %v2218
        %2220 = vmatmul.bf16.gmra.mxu0 %v1999
        %v2221 = vpop.f32.mrf.mxu0
        %v2222 = vadd.f32 0.0, %v2221
        %v2223 = vpop.f32.mrf.mxu0
        %v2224 = vadd.f32 0.0, %v2223
        %2225 = vdwg.mxu0
        %2226 = vmatpush.bf16.msra.mxu0 0
        %2227 = vmatpush.bf16.msra.mxu0 0
        %2228 = vmatpush.bf16.msra.mxu0 0
        %2229 = vmatpush.bf16.msra.mxu0 0
        %2230 = vmatpush.bf16.msra.mxu0 %v2076
        %2231 = vmatpush.bf16.msra.mxu0 %v2075
        %2232 = vmatpush.bf16.msra.mxu0 %v2074
        %2233 = vmatpush.bf16.msra.mxu0 %v2073
        %2234 = vmatmul.bf16.gmra.mxu0 %v2090
        %v2235 = vpop.f32.mrf.mxu0
        %v2236 = vadd.f32 %v2147, %v2235
        %v2237 = vpop.f32.mrf.mxu0
        %v2238 = vadd.f32 %v2149, %v2237
        %2239 = vmatmul.bf16.gmra.mxu0 %v2093
        %v2240 = vpop.f32.mrf.mxu0
        %v2241 = vadd.f32 %v2152, %v2240
        %v2242 = vpop.f32.mrf.mxu0
        %v2243 = vadd.f32 %v2154, %v2242
        %2244 = vmatmul.bf16.gmra.mxu0 %v2096
        %v2245 = vpop.f32.mrf.mxu0
        %v2246 = vadd.f32 %v2157, %v2245
        %v2247 = vpop.f32.mrf.mxu0
        %v2248 = vadd.f32 %v2159, %v2247
        %2249 = vmatmul.bf16.gmra.mxu0 %v2099
        %v2250 = vpop.f32.mrf.mxu0
        %v2251 = vadd.f32 %v2162, %v2250
        %v2252 = vpop.f32.mrf.mxu0
        %v2253 = vadd.f32 %v2164, %v2252
        %2254 = vmatmul.bf16.gmra.mxu0 %v2102
        %v2255 = vpop.f32.mrf.mxu0
        %v2256 = vadd.f32 %v2167, %v2255
        %v2257 = vpop.f32.mrf.mxu0
        %v2258 = vadd.f32 %v2169, %v2257
        %2259 = vmatmul.bf16.gmra.mxu0 %v2105
        %v2260 = vpop.f32.mrf.mxu0
        %v2261 = vadd.f32 %v2172, %v2260
        %v2262 = vpop.f32.mrf.mxu0
        %v2263 = vadd.f32 %v2174, %v2262
        %2264 = vmatmul.bf16.gmra.mxu0 %v2108
        %v2265 = vpop.f32.mrf.mxu0
        %v2266 = vadd.f32 %v2177, %v2265
        %v2267 = vpop.f32.mrf.mxu0
        %v2268 = vadd.f32 %v2179, %v2267
        %2269 = vmatmul.bf16.gmra.mxu0 %v2111
        %v2270 = vpop.f32.mrf.mxu0
        %v2271 = vadd.f32 %v2182, %v2270
        %v2272 = vpop.f32.mrf.mxu0
        %v2273 = vadd.f32 %v2184, %v2272
        %2274 = vmatmul.bf16.gmra.mxu0 %v2114
        %v2275 = vpop.f32.mrf.mxu0
        %v2276 = vadd.f32 %v2187, %v2275
        %v2277 = vpop.f32.mrf.mxu0
        %v2278 = vadd.f32 %v2189, %v2277
        %2279 = vmatmul.bf16.gmra.mxu0 %v2117
        %v2280 = vpop.f32.mrf.mxu0
        %v2281 = vadd.f32 %v2192, %v2280
        %v2282 = vpop.f32.mrf.mxu0
        %v2283 = vadd.f32 %v2194, %v2282
        %2284 = vmatmul.bf16.gmra.mxu0 %v2120
        %v2285 = vpop.f32.mrf.mxu0
        %v2286 = vadd.f32 %v2197, %v2285
        %v2287 = vpop.f32.mrf.mxu0
        %v2288 = vadd.f32 %v2199, %v2287
        %2289 = vmatmul.bf16.gmra.mxu0 %v2123
        %v2290 = vpop.f32.mrf.mxu0
        %v2291 = vadd.f32 %v2202, %v2290
        %v2292 = vpop.f32.mrf.mxu0
        %v2293 = vadd.f32 %v2204, %v2292
        %2294 = vmatmul.bf16.gmra.mxu0 %v2126
        %v2295 = vpop.f32.mrf.mxu0
        %v2296 = vadd.f32 %v2207, %v2295
        %v2297 = vpop.f32.mrf.mxu0
        %v2298 = vadd.f32 %v2209, %v2297
        %2299 = vmatmul.bf16.gmra.mxu0 %v2129
        %v2300 = vpop.f32.mrf.mxu0
        %v2301 = vadd.f32 %v2212, %v2300
        %v2302 = vpop.f32.mrf.mxu0
        %v2303 = vadd.f32 %v2214, %v2302
        %2304 = vmatmul.bf16.gmra.mxu0 %v2132
        %v2305 = vpop.f32.mrf.mxu0
        %v2306 = vadd.f32 %v2217, %v2305
        %v2307 = vpop.f32.mrf.mxu0
        %v2308 = vadd.f32 %v2219, %v2307
        %2309 = vmatmul.bf16.gmra.mxu0 %v2135
        %v2310 = vpop.f32.mrf.mxu0
        %v2311 = vadd.f32 %v2222, %v2310
        %v2312 = vpop.f32.mrf.mxu0
        %v2313 = vadd.f32 %v2224, %v2312
        %2314 = vdwg.mxu0
        %v2315 = vadd.f32 %v1816, %v2236
        %v2316 = vadd.f32 %v1817, %v2238
        %v2317 = vadd.f32 %v1818, %v2241
        %v2318 = vadd.f32 %v1819, %v2243
        %v2319 = vadd.f32 %v1820, %v2246
        %v2320 = vadd.f32 %v1821, %v2248
        %v2321 = vadd.f32 %v1822, %v2251
        %v2322 = vadd.f32 %v1823, %v2253
        %v2323 = vadd.f32 %v1824, %v2256
        %v2324 = vadd.f32 %v1825, %v2258
        %v2325 = vadd.f32 %v1826, %v2261
        %v2326 = vadd.f32 %v1827, %v2263
        %v2327 = vadd.f32 %v1828, %v2266
        %v2328 = vadd.f32 %v1829, %v2268
        %v2329 = vadd.f32 %v1830, %v2271
        %v2330 = vadd.f32 %v1831, %v2273
        %v2331 = vadd.f32 %v1832, %v2276
        %v2332 = vadd.f32 %v1833, %v2278
        %v2333 = vadd.f32 %v1834, %v2281
        %v2334 = vadd.f32 %v1835, %v2283
        %v2335 = vadd.f32 %v1836, %v2286
        %v2336 = vadd.f32 %v1837, %v2288
        %v2337 = vadd.f32 %v1838, %v2291
        %v2338 = vadd.f32 %v1839, %v2293
        %v2339 = vadd.f32 %v1840, %v2296
        %v2340 = vadd.f32 %v1841, %v2298
        %v2341 = vadd.f32 %v1842, %v2301
        %v2342 = vadd.f32 %v1843, %v2303
        %v2343 = vadd.f32 %v1844, %v2306
        %v2344 = vadd.f32 %v1845, %v2308
        %v2345 = vadd.f32 %v1846, %v2311
        %v2346 = vadd.f32 %v1847, %v2313
        %2347 = vst [vmem:[#allocation2] sm:$0xff] %v2315
        %2348 = vst [vmem:[#allocation2 + $0x8] sm:$0xff] %v2316
        %2349 = vst [vmem:[#allocation2 + $0x10] sm:$0xff] %v2317
        %2350 = vst [vmem:[#allocation2 + $0x18] sm:$0xff] %v2318
        %2351 = vst [vmem:[#allocation2 + $0x20] sm:$0xff] %v2319
        %2352 = vst [vmem:[#allocation2 + $0x28] sm:$0xff] %v2320
        %2353 = vst [vmem:[#allocation2 + $0x30] sm:$0xff] %v2321
        %2354 = vst [vmem:[#allocation2 + $0x38] sm:$0xff] %v2322
        %2355 = vst [vmem:[#allocation2 + $0x40] sm:$0xff] %v2323
        %2356 = vst [vmem:[#allocation2 + $0x48] sm:$0xff] %v2324
        %2357 = vst [vmem:[#allocation2 + $0x50] sm:$0xff] %v2325
        %2358 = vst [vmem:[#allocation2 + $0x58] sm:$0xff] %v2326
        %2359 = vst [vmem:[#allocation2 + $0x60] sm:$0xff] %v2327
        %2360 = vst [vmem:[#allocation2 + $0x68] sm:$0xff] %v2328
        %2361 = vst [vmem:[#allocation2 + $0x70] sm:$0xff] %v2329
        %2362 = vst [vmem:[#allocation2 + $0x78] sm:$0xff] %v2330
        %2363 = vst [vmem:[#allocation2 + $0x80] sm:$0xff] %v2331
        %2364 = vst [vmem:[#allocation2 + $0x88] sm:$0xff] %v2332
        %2365 = vst [vmem:[#allocation2 + $0x90] sm:$0xff] %v2333
        %2366 = vst [vmem:[#allocation2 + $0x98] sm:$0xff] %v2334
        %2367 = vst [vmem:[#allocation2 + $0xa0] sm:$0xff] %v2335
        %2368 = vst [vmem:[#allocation2 + $0xa8] sm:$0xff] %v2336
        %2369 = vst [vmem:[#allocation2 + $0xb0] sm:$0xff] %v2337
        %2370 = vst [vmem:[#allocation2 + $0xb8] sm:$0xff] %v2338
        %2371 = vst [vmem:[#allocation2 + $0xc0] sm:$0xff] %v2339
        %2372 = vst [vmem:[#allocation2 + $0xc8] sm:$0xff] %v2340
        %2373 = vst [vmem:[#allocation2 + $0xd0] sm:$0xff] %v2341
        %2374 = vst [vmem:[#allocation2 + $0xd8] sm:$0xff] %v2342
        %2375 = vst [vmem:[#allocation2 + $0xe0] sm:$0xff] %v2343
        %2376 = vst [vmem:[#allocation2 + $0xe8] sm:$0xff] %v2344
        %2377 = vst [vmem:[#allocation2 + $0xf0] sm:$0xff] %v2345
        %2378 = vst [vmem:[#allocation2 + $0xf8] sm:$0xff] %v2346
        %v2379 = vld [vmem:[#allocation2] sm:$0xff]
        %v2380 = vld [vmem:[#allocation2 + $0x8] sm:$0xff]
        %v2381 = vld [vmem:[#allocation2 + $0x10] sm:$0xff]
        %v2382 = vld [vmem:[#allocation2 + $0x18] sm:$0xff]
        %v2383 = vld [vmem:[#allocation2 + $0x20] sm:$0xff]
        %v2384 = vld [vmem:[#allocation2 + $0x28] sm:$0xff]
        %v2385 = vld [vmem:[#allocation2 + $0x30] sm:$0xff]
        %v2386 = vld [vmem:[#allocation2 + $0x38] sm:$0xff]
        %v2387 = vld [vmem:[#allocation2 + $0x40] sm:$0xff]
        %v2388 = vld [vmem:[#allocation2 + $0x48] sm:$0xff]
        %v2389 = vld [vmem:[#allocation2 + $0x50] sm:$0xff]
        %v2390 = vld [vmem:[#allocation2 + $0x58] sm:$0xff]
        %v2391 = vld [vmem:[#allocation2 + $0x60] sm:$0xff]
        %v2392 = vld [vmem:[#allocation2 + $0x68] sm:$0xff]
        %v2393 = vld [vmem:[#allocation2 + $0x70] sm:$0xff]
        %v2394 = vld [vmem:[#allocation2 + $0x78] sm:$0xff]
        %v2395 = vld [vmem:[#allocation2 + $0x80] sm:$0xff]
        %v2396 = vld [vmem:[#allocation2 + $0x88] sm:$0xff]
        %v2397 = vld [vmem:[#allocation2 + $0x90] sm:$0xff]
        %v2398 = vld [vmem:[#allocation2 + $0x98] sm:$0xff]
        %v2399 = vld [vmem:[#allocation2 + $0xa0] sm:$0xff]
        %v2400 = vld [vmem:[#allocation2 + $0xa8] sm:$0xff]
        %v2401 = vld [vmem:[#allocation2 + $0xb0] sm:$0xff]
        %v2402 = vld [vmem:[#allocation2 + $0xb8] sm:$0xff]
        %v2403 = vld [vmem:[#allocation2 + $0xc0] sm:$0xff]
        %v2404 = vld [vmem:[#allocation2 + $0xc8] sm:$0xff]
        %v2405 = vld [vmem:[#allocation2 + $0xd0] sm:$0xff]
        %v2406 = vld [vmem:[#allocation2 + $0xd8] sm:$0xff]
        %v2407 = vld [vmem:[#allocation2 + $0xe0] sm:$0xff]
        %v2408 = vld [vmem:[#allocation2 + $0xe8] sm:$0xff]
        %v2409 = vld [vmem:[#allocation2 + $0xf0] sm:$0xff]
        %v2410 = vld [vmem:[#allocation2 + $0xf8] sm:$0xff]
        %2411 = vxpose.xlu0.b32.start [1/16] %v2379, 128
        %2412 = vxpose.xlu0.b32.cont [2/16] %v2380, 128
        %2413 = vxpose.xlu0.b32.cont [3/16] %v2381, 128
        %2414 = vxpose.xlu0.b32.cont [4/16] %v2382, 128
        %2415 = vxpose.xlu0.b32.cont [5/16] %v2383, 128
        %2416 = vxpose.xlu0.b32.cont [6/16] %v2384, 128
        %2417 = vxpose.xlu0.b32.cont [7/16] %v2385, 128
        %2418 = vxpose.xlu0.b32.cont [8/16] %v2386, 128
        %2419 = vxpose.xlu0.b32.cont [9/16] %v2387, 128
        %2420 = vxpose.xlu0.b32.cont [10/16] %v2388, 128
        %2421 = vxpose.xlu0.b32.cont [11/16] %v2389, 128
        %2422 = vxpose.xlu0.b32.cont [12/16] %v2390, 128
        %2423 = vxpose.xlu0.b32.cont [13/16] %v2391, 128
        %2424 = vxpose.xlu0.b32.cont [14/16] %v2392, 128
        %2425 = vxpose.xlu0.b32.cont [15/16] %v2393, 128
        %2426 = vxpose.xlu0.b32.end [16/16] %v2394, 128
        %v2427 = vpop.trf.xlu0
        %v2428 = vpop.trf.xlu0
        %v2429 = vpop.trf.xlu0
        %v2430 = vpop.trf.xlu0
        %v2431 = vpop.trf.xlu0
        %v2432 = vpop.trf.xlu0
        %v2433 = vpop.trf.xlu0
        %v2434 = vpop.trf.xlu0
        %v2435 = vpop.trf.xlu0
        %v2436 = vpop.trf.xlu0
        %v2437 = vpop.trf.xlu0
        %v2438 = vpop.trf.xlu0
        %v2439 = vpop.trf.xlu0
        %v2440 = vpop.trf.xlu0
        %v2441 = vpop.trf.xlu0
        %v2442 = vpop.trf.xlu0
        %2443 = vxpose.xlu0.b32.start [1/16] %v2395, 128
        %2444 = vxpose.xlu0.b32.cont [2/16] %v2396, 128
        %2445 = vxpose.xlu0.b32.cont [3/16] %v2397, 128
        %2446 = vxpose.xlu0.b32.cont [4/16] %v2398, 128
        %2447 = vxpose.xlu0.b32.cont [5/16] %v2399, 128
        %2448 = vxpose.xlu0.b32.cont [6/16] %v2400, 128
        %2449 = vxpose.xlu0.b32.cont [7/16] %v2401, 128
        %2450 = vxpose.xlu0.b32.cont [8/16] %v2402, 128
        %2451 = vxpose.xlu0.b32.cont [9/16] %v2403, 128
        %2452 = vxpose.xlu0.b32.cont [10/16] %v2404, 128
        %2453 = vxpose.xlu0.b32.cont [11/16] %v2405, 128
        %2454 = vxpose.xlu0.b32.cont [12/16] %v2406, 128
        %2455 = vxpose.xlu0.b32.cont [13/16] %v2407, 128
        %2456 = vxpose.xlu0.b32.cont [14/16] %v2408, 128
        %2457 = vxpose.xlu0.b32.cont [15/16] %v2409, 128
        %2458 = vxpose.xlu0.b32.end [16/16] %v2410, 128
        %v2459 = vpop.trf.xlu0
        %v2460 = vpop.trf.xlu0
        %v2461 = vpop.trf.xlu0
        %v2462 = vpop.trf.xlu0
        %v2463 = vpop.trf.xlu0
        %v2464 = vpop.trf.xlu0
        %v2465 = vpop.trf.xlu0
        %v2466 = vpop.trf.xlu0
        %v2467 = vpop.trf.xlu0
        %v2468 = vpop.trf.xlu0
        %v2469 = vpop.trf.xlu0
        %v2470 = vpop.trf.xlu0
        %v2471 = vpop.trf.xlu0
        %v2472 = vpop.trf.xlu0
        %v2473 = vpop.trf.xlu0
        %v2474 = vpop.trf.xlu0
        %2475 = vst [vmem:[%s555] sm:$0xff] %v2427
        %2476 = vst [vmem:[%s555 + $0x8] sm:$0xff] %v2459
        %2477 = vst [vmem:[%s555 + $0x10] sm:$0xff] %v2428
        %2478 = vst [vmem:[%s555 + $0x18] sm:$0xff] %v2460
        %2479 = vst [vmem:[%s555 + $0x20] sm:$0xff] %v2429
        %2480 = vst [vmem:[%s555 + $0x28] sm:$0xff] %v2461
        %2481 = vst [vmem:[%s555 + $0x30] sm:$0xff] %v2430
        %2482 = vst [vmem:[%s555 + $0x38] sm:$0xff] %v2462
        %2483 = vst [vmem:[%s555 + $0x40] sm:$0xff] %v2431
        %2484 = vst [vmem:[%s555 + $0x48] sm:$0xff] %v2463
        %2485 = vst [vmem:[%s555 + $0x50] sm:$0xff] %v2432
        %2486 = vst [vmem:[%s555 + $0x58] sm:$0xff] %v2464
        %2487 = vst [vmem:[%s555 + $0x60] sm:$0xff] %v2433
        %2488 = vst [vmem:[%s555 + $0x68] sm:$0xff] %v2465
        %2489 = vst [vmem:[%s555 + $0x70] sm:$0xff] %v2434
        %2490 = vst [vmem:[%s555 + $0x78] sm:$0xff] %v2466
        %2491 = vst [vmem:[%s555 + $0x80] sm:$0xff] %v2435
        %2492 = vst [vmem:[%s555 + $0x88] sm:$0xff] %v2467
        %2493 = vst [vmem:[%s555 + $0x90] sm:$0xff] %v2436
        %2494 = vst [vmem:[%s555 + $0x98] sm:$0xff] %v2468
        %2495 = vst [vmem:[%s555 + $0xa0] sm:$0xff] %v2437
        %2496 = vst [vmem:[%s555 + $0xa8] sm:$0xff] %v2469
        %2497 = vst [vmem:[%s555 + $0xb0] sm:$0xff] %v2438
        %2498 = vst [vmem:[%s555 + $0xb8] sm:$0xff] %v2470
        %2499 = vst [vmem:[%s555 + $0xc0] sm:$0xff] %v2439
        %2500 = vst [vmem:[%s555 + $0xc8] sm:$0xff] %v2471
        %2501 = vst [vmem:[%s555 + $0xd0] sm:$0xff] %v2440
        %2502 = vst [vmem:[%s555 + $0xd8] sm:$0xff] %v2472
        %2503 = vst [vmem:[%s555 + $0xe0] sm:$0xff] %v2441
        %2504 = vst [vmem:[%s555 + $0xe8] sm:$0xff] %v2473
        %2505 = vst [vmem:[%s555 + $0xf0] sm:$0xff] %v2442
        %2506 = vst [vmem:[%s555 + $0xf8] sm:$0xff] %v2474
        %s2507 = smul.u32 16, %s19
        %p2508 = scmp.lt.s32.totalorder %s18, 1
        %s2509 = scalar_select %p2508, %s18, 1
        %p2510 = scmp.lt.s32.totalorder %s2507, 31
        %s2511 = scalar_select %p2510, %s2507, 31
        %s2512 = smul.addr %s2511, 2
        %s2513 = smul.addr %s2509, 64
        %s2514 = sadd.s32 %s2512, %s2513
        %s2515 = smul.addr %s2514, 8
        %s2516 = scalar_lea.vmem %s3, %s2515
        // Predicated region
        $region74: #{conv2d_add.1} parent=68 // pred_check
          %p2517 = pneg %p124
        $region75: #{conv2d_add.1} parent=68 // pred_check_branch
          %2519 = sbr.rel (%p2517) target = $region77
        $region76: #{conv2d_add.1} parent=68 // pred_region
          %s2520 = smul.u32 16, %s19
        $region77: #{conv2d_add.1} parent=68 // pred_fallthru
          _
      $region69: #{conv2d_add.1} parent=5 // pred_fallthru
        _
      %p2521 = scmp.le.s32.totalorder 2, %s9
      // Predicated region
      $region78: #{conv2d_add.1} parent=5 // pred_check
        %p2522 = pneg %p2521
      $region79: #{conv2d_add.1} parent=5 // pred_check_branch
        %2524 = sbr.rel (%p2522) target = $region81
      $region80: #{conv2d_add.1} parent=5 // pred_region
        %s2525 = ssub.s32 %s9, 2
        // Predicated region
        $region82: #{conv2d_add.1} parent=80 // pred_check
          %p2526 = pneg %p130
        $region83: #{conv2d_add.1} parent=80 // pred_check_branch
          %2528 = sbr.rel (%p2526) target = $region85
        $region84: #{conv2d_add.1} parent=80 // pred_region
          %s2529 = smul.u32 16, %s21
          %p2530 = scmp.lt.s32.totalorder %s20, 1
          %s2531 = scalar_select %p2530, %s20, 1
          %p2532 = scmp.lt.s32.totalorder %s2529, 31
          %s2533 = scalar_select %p2532, %s2529, 31
          %s2534 = smul.addr %s2533, 2
          %s2535 = smul.addr %s2531, 64
          %s2536 = sadd.s32 %s2534, %s2535
          %s2537 = smul.addr %s2536, 8
          %s2538 = scalar_lea.vmem %s3, %s2537
        $region85: #{conv2d_add.1} parent=80 // pred_fallthru
          _
      $region81: #{conv2d_add.1} parent=5 // pred_fallthru
        _
    $region6: #{conv2d_add.1} parent=1 // loop_footer
      %s13 = sadd.s32 1, %s9
    $region7: #{conv2d_add.1} parent=1 // loop_footer_branch
      %8 = sbr.rel target = $region3
    $region8: #{conv2d_add.1} parent=1 // loop_exit
      _

</llo_original>
